<compile_context>
chip_gen: v7x
topology: tpu7x:2x2x1
jax: 0.10.0
libtpu: 0.0.40
codegen_flags: <defaults>
</compile_context>

<pallas_src>
import functools

import jax
import jax.numpy as jnp
from jax.experimental import pallas as pl
from jax.experimental.pallas import tpu as pltpu

EPS = 1e-5


# ------------------------------ Pallas kernel ------------------------------

def _res_block_kernel(x_ref, mask_ref, w1_ref, wk_ref, gb_ref, o_ref,
                      pad_ref, patch_ref, *,
                      cp, length, wp, kh_dim, kw_dim, pad, off, count,
                      has_shortcut):
    """Fused ResBlock2d forward on a (cp, length) channel-major padded-flat slab.

    x_ref:     (cp, length)       input activations (pad rows / pad positions = 0
                                   for the first block; later blocks carry harmless
                                   garbage at pad positions which is masked out)
    mask_ref:  (1, length)        1.0 at valid (n, h, w) positions, 0.0 at pad
    w1_ref:    (cp, 3*cp)         packed 1x1 weights [init | out | shortcut]
    wk_ref:    (cp, kh*kw*cp)     packed kxk weights (im2col layout)
    gb_ref:    (cp, 8)            packed (gamma, beta) pairs for the 4 convs
    o_ref:     (cp, length)       block output (same layout as input)
    pad_ref:   (cp, length+2*off) VMEM scratch: zero-margined shift buffer
    patch_ref: (kh*kw*cp, length) VMEM scratch: im2col patch matrix
    """
    x = x_ref[...]                       # (cp, length)
    mask = mask_ref[...]                 # (1, length)
    inv_n = 1.0 / count

    def conv_bn(acc, idx, relu):
        # Training-mode BatchNorm2d on the conv output `acc`; statistics over the
        # `count` valid positions only, folded into one scale/offset pass.
        gamma = gb_ref[:, 2 * idx:2 * idx + 1]        # (cp, 1)
        beta = gb_ref[:, 2 * idx + 1:2 * idx + 2]     # (cp, 1)
        mean = jnp.sum(acc * mask, axis=1, keepdims=True) * inv_n
        diff = (acc - mean) * mask
        var = jnp.sum(diff * diff, axis=1, keepdims=True) * inv_n
        scale = gamma * jax.lax.rsqrt(var + EPS)
        offset = beta - mean * scale
        y = acc * scale + offset
        return jnp.maximum(y, 0.0) if relu else y

    def conv1x1(inp, idx):
        w = w1_ref[:, idx * cp:(idx + 1) * cp]        # (cp, cp)
        return jnp.dot(w, inp, preferred_element_type=jnp.float32)

    # ---- init: 1x1 conv + BN + ReLU ----
    h = conv_bn(conv1x1(x, 0), 0, relu=True)

    # ---- kxk conv + BN + ReLU (im2col, single MXU matmul) ----
    pad_ref[...] = jnp.zeros_like(pad_ref)
    pad_ref[:, off:off + length] = h * mask           # zero-pad the spatial border
    base = off - (pad * wp + pad)
    for kh in range(kh_dim):
        for kw in range(kw_dim):
            t = kh * kw_dim + kw
            start = base + kh * wp + kw
            patch_ref[t * cp:(t + 1) * cp, :] = pad_ref[:, start:start + length]
    h = conv_bn(jnp.dot(wk_ref[...], patch_ref[...],
                        preferred_element_type=jnp.float32), 1, relu=True)

    # ---- out: 1x1 conv + BN ----
    h = conv_bn(conv1x1(h, 1), 2, relu=False)

    # ---- shortcut (1x1 conv + BN, or identity) + add + ReLU ----
    if has_shortcut:
        s = conv_bn(conv1x1(x, 2), 3, relu=False)
    else:
        s = x
    o_ref[...] = jnp.maximum(h + s, 0.0)


def _res_block_call(x_flat, mask, w1, wk, gb, *, cp, length, wp, k, pad, off,
                    count, has_shortcut):
    kern = functools.partial(
        _res_block_kernel, cp=cp, length=length, wp=wp, kh_dim=k, kw_dim=k,
        pad=pad, off=off, count=count, has_shortcut=has_shortcut)
    vmem = pl.BlockSpec(memory_space=pltpu.MemorySpace.VMEM)
    return pl.pallas_call(
        kern,
        out_shape=jax.ShapeDtypeStruct((cp, length), jnp.float32),
        in_specs=[vmem] * 5,
        out_specs=vmem,
        scratch_shapes=[
            pltpu.VMEM((cp, length + 2 * off), jnp.float32),   # shift buffer
            pltpu.VMEM((k * k * cp, length), jnp.float32),     # im2col patch
        ],
    )(x_flat, mask, w1, wk, gb)


# --------------------------- layout / packing utils ---------------------------

def _round_up(x, m):
    return ((x + m - 1) // m) * m


def _pack_w1(w, cp):
    """(cout, cin, 1, 1) PyTorch conv weight -> zero-padded (cp, cp)."""
    cout, cin = w.shape[0], w.shape[1]
    w2 = w[:, :, 0, 0].astype(jnp.float32)
    return jnp.pad(w2, ((0, cp - cout), (0, cp - cin)))


def _pack_wk(w, cp):
    """(cout, cin, kh, kw) -> (cp, kh*kw*cp) im2col weight, zero-padded."""
    cout, cin, kh, kw = w.shape
    wt = jnp.transpose(w, (0, 2, 3, 1)).astype(jnp.float32)   # (cout, kh, kw, cin)
    wt = jnp.pad(wt, ((0, cp - cout), (0, 0), (0, 0), (0, cp - cin)))
    return wt.reshape(cp, kh * kw * cp)


def _pack_gb(gamma, beta, cp):
    g = jnp.pad(gamma.astype(jnp.float32), (0, cp - gamma.shape[0]))
    b = jnp.pad(beta.astype(jnp.float32), (0, cp - beta.shape[0]))
    return jnp.stack([g, b], axis=1)                           # (cp, 2)


def _make_mask(n, h, w, pad):
    hp, wp = h + 2 * pad, w + 2 * pad
    m = jnp.zeros((n, hp, wp), jnp.float32)
    m = m.at[:, pad:pad + h, pad:pad + w].set(1.0)
    return m.reshape(1, n * hp * wp)


def _to_flat(x_nchw, cp, pad):
    n, c, h, w = x_nchw.shape
    x = jnp.transpose(x_nchw, (1, 0, 2, 3)).astype(jnp.float32)   # (c, n, h, w)
    x = jnp.pad(x, ((0, cp - c), (0, 0), (pad, pad), (pad, pad)))
    return x.reshape(cp, -1)                                      # (cp, n*hp*wp)


def _from_flat(y_flat, n, cout, h, w, pad):
    hp, wp = h + 2 * pad, w + 2 * pad
    y = y_flat.reshape(y_flat.shape[0], n, hp, wp)
    y = y[:cout, :, pad:pad + h, pad:pad + w]
    return jnp.transpose(y, (1, 0, 2, 3))                         # (n, cout, h, w)


# ------------------------- parameter initialization ------------------------

def init_conv_norm(key, cin, cout, k):
    """Deterministic init matching Conv2d + BatchNorm2d parameter shapes.

    The conv bias is kept for shape fidelity with the PyTorch module but is
    mathematically cancelled by training-mode BN and is not used in the kernel.
    """
    wk, bk = jax.random.split(key)
    fan_in = cin * k * k
    bound = 1.0 / (fan_in ** 0.5)
    w = jax.random.uniform(wk, (cout, cin, k, k), jnp.float32, -bound, bound)
    b = jax.random.uniform(bk, (cout,), jnp.float32, -bound, bound)
    gamma = jnp.ones((cout,), jnp.float32)   # BN weight
    beta = jnp.zeros((cout,), jnp.float32)   # BN bias
    return (w, b, gamma, beta)


def init_res_block(key, cin, cout, k, channel_divsor=4):
    assert k % 2 == 1 and cout >= channel_divsor
    ch = cout // channel_divsor
    keys = jax.random.split(key, 4)
    return {
        "init": init_conv_norm(keys[0], cin, ch, 1),
        "conv": init_conv_norm(keys[1], ch, ch, k),
        "out": init_conv_norm(keys[2], ch, cout, 1),
        "shortcut": init_conv_norm(keys[3], cin, cout, 1) if cin != cout else None,
        "k": k,
    }


def init_res_blocks(key, cin, cout, k, nlayers, channel_divsor=4):
    assert nlayers >= 1
    keys = jax.random.split(key, nlayers)
    blocks = [init_res_block(keys[0], cin, cout, k, channel_divsor)]
    for i in range(1, nlayers):
        blocks.append(init_res_block(keys[i], cout, cout, k, channel_divsor))
    return blocks


# ------------------------------ forward passes ------------------------------

def res_blocks_forward(x_nchw, blocks):
    """ResBlocks2d.forward on a PyTorch-style NCHW input (fused Pallas blocks)."""
    n, cin, h, w = x_nchw.shape
    k = blocks[0]["k"]
    pad = k // 2
    cout = blocks[0]["out"][0].shape[0]
    cp = _round_up(max(cin, cout), 8)
    hp, wp = h + 2 * pad, w + 2 * pad
    length = n * hp * wp
    count = n * h * w
    off = _round_up(pad * wp + pad, 128) if pad else 0

    mask = _make_mask(n, h, w, pad)
    x = _to_flat(x_nchw, cp, pad)
    for p in blocks:
        has_sc = p["shortcut"] is not None
        w1 = jnp.concatenate(
            [_pack_w1(p["init"][0], cp),
             _pack_w1(p["out"][0], cp),
             _pack_w1(p["shortcut"][0], cp) if has_sc
             else jnp.zeros((cp, cp), jnp.float32)], axis=1)
        wk = _pack_wk(p["conv"][0], cp)
        gb = jnp.concatenate(
            [_pack_gb(p["init"][2], p["init"][3], cp),
             _pack_gb(p["conv"][2], p["conv"][3], cp),
             _pack_gb(p["out"][2], p["out"][3], cp),
             _pack_gb(p["shortcut"][2], p["shortcut"][3], cp) if has_sc
             else jnp.zeros((cp, 2), jnp.float32)], axis=1)
        x = _res_block_call(x, mask, w1, wk, gb, cp=cp, length=length, wp=wp,
                            k=k, pad=pad, off=off, count=count,
                            has_shortcut=has_sc)
    return _from_flat(x, n, cout, h, w, pad)


# ---------------------- pure-JAX reference (for checking) -------------------

def _conv_norm_ref(x, params, padding, relu):
    w, b, gamma, beta = params
    y = jax.lax.conv_general_dilated(
        x, w, window_strides=(1, 1),
        padding=[(padding, padding), (padding, padding)],
        dimension_numbers=("NCHW", "OIHW", "NCHW"))
    y = y + b[None, :, None, None]
    mean = jnp.mean(y, axis=(0, 2, 3), keepdims=True)
    var = jnp.mean((y - mean) ** 2, axis=(0, 2, 3), keepdims=True)
    y = ((y - mean) * jax.lax.rsqrt(var + EPS)
         * gamma[None, :, None, None] + beta[None, :, None, None])
    return jnp.maximum(y, 0.0) if relu else y


def _res_blocks_ref(x, blocks):
    for p in blocks:
        k = p["k"]
        h = _conv_norm_ref(x, p["init"], 0, True)
        h = _conv_norm_ref(h, p["conv"], k // 2, True)
        h = _conv_norm_ref(h, p["out"], 0, False)
        s = (_conv_norm_ref(x, p["shortcut"], 0, False)
             if p["shortcut"] is not None else x)
        x = jnp.maximum(h + s, 0.0)
    return x


# ---------------------------------- main ------------------------------------

if __name__ == "__main__":
    key = jax.random.PRNGKey(0)
    pkey, xkey = jax.random.split(key)

    in_channels, out_channels, kernel_size, nlayers = 4, 8, 3, 2
    blocks = init_res_blocks(pkey, in_channels, out_channels, kernel_size, nlayers)

    x = jax.random.normal(xkey, (2, in_channels, 16, 16), jnp.float32)  # NCHW

    y = jax.block_until_ready(res_blocks_forward(x, blocks))
    assert y.shape == (2, out_channels, 16, 16), y.shape
    assert bool(jnp.all(jnp.isfinite(y)))
    assert bool(jnp.all(y >= 0.0))          # final op is ReLU

    # Cross-check the fused Pallas path against a plain-JAX transcription of the
    # PyTorch module (conv + bias -> training-mode BN -> relu ...).
    y_ref = jax.block_until_ready(_res_blocks_ref(x, blocks))
    err = float(jnp.max(jnp.abs(y - y_ref)))
    assert err < 1e-2, err

    print("KERNEL_OK")
</pallas_src>

<mosaic_0001>
module attributes {stable_mosaic.version = 11 : i64} {
  func.func @_res_block_kernel(%arg0: memref<8x648xf32, #tpu.memory_space<vmem>>, %arg1: memref<1x648xf32, #tpu.memory_space<vmem>>, %arg2: memref<8x24xf32, #tpu.memory_space<vmem>>, %arg3: memref<8x72xf32, #tpu.memory_space<vmem>>, %arg4: memref<8x8xf32, #tpu.memory_space<vmem>>, %arg5: memref<8x648xf32, #tpu.memory_space<vmem>>, %arg6: memref<8x904xf32, #tpu.memory_space<vmem>>, %arg7: memref<72x648xf32, #tpu.memory_space<vmem>>) attributes {dimension_semantics = [], scalar_prefetch = 0 : i64, scratch_operands = 2 : i64, tpu.core_type = #tpu.core_type<tc>} {
    %c0 = arith.constant 0 : index
    %c0_0 = arith.constant 0 : index
    %0 = vector.load %arg0[%c0, %c0_0] : memref<8x648xf32, #tpu.memory_space<vmem>>, vector<8x648xf32>
    %c0_1 = arith.constant 0 : index
    %c0_2 = arith.constant 0 : index
    %1 = vector.load %arg1[%c0_1, %c0_2] : memref<1x648xf32, #tpu.memory_space<vmem>>, vector<1x648xf32>
    %c0_3 = arith.constant 0 : index
    %c0_4 = arith.constant 0 : index
    %2 = vector.load %arg2[%c0_3, %c0_4] : memref<8x24xf32, #tpu.memory_space<vmem>>, vector<8x8xf32>
    %cst = arith.constant dense<0.000000e+00> : vector<8x648xf32>
    %3 = tpu.matmul %2, %0, %cst {dimension_numbers = #tpu.dot_dimension_numbers<[1], [0], [0], [1], [0, 0, 1, 1], [], []>} : vector<8x8xf32>, vector<8x648xf32>, vector<8x648xf32> -> vector<8x648xf32>
    %c0_5 = arith.constant 0 : index
    %c0_6 = arith.constant 0 : index
    %4 = vector.load %arg4[%c0_5, %c0_6] : memref<8x8xf32, #tpu.memory_space<vmem>>, vector<8x1xf32>
    %c0_7 = arith.constant 0 : index
    %c1 = arith.constant 1 : index
    %5 = vector.load %arg4[%c0_7, %c1] : memref<8x8xf32, #tpu.memory_space<vmem>>, vector<8x1xf32>
    %6 = vector.broadcast %1 : vector<1x648xf32> to vector<8x648xf32>
    %7 = arith.mulf %3, %6 : vector<8x648xf32>
    %cst_8 = arith.constant dense<0.000000e+00> : vector<8xf32>
    %8 = vector.multi_reduction <add>, %7, %cst_8 [1] : vector<8x648xf32> to vector<8xf32>
    %9 = vector.shape_cast %8 : vector<8xf32> to vector<8x1xf32>
    %cst_9 = arith.constant 0.001953125 : f32
    %10 = vector.broadcast %cst_9 : f32 to vector<8x1xf32>
    %11 = arith.mulf %9, %10 : vector<8x1xf32>
    %12 = vector.broadcast %11 : vector<8x1xf32> to vector<8x648xf32>
    %13 = arith.subf %3, %12 : vector<8x648xf32>
    %14 = vector.broadcast %1 : vector<1x648xf32> to vector<8x648xf32>
    %15 = arith.mulf %13, %14 : vector<8x648xf32>
    %16 = arith.mulf %15, %15 : vector<8x648xf32>
    %cst_10 = arith.constant dense<0.000000e+00> : vector<8xf32>
    %17 = vector.multi_reduction <add>, %16, %cst_10 [1] : vector<8x648xf32> to vector<8xf32>
    %18 = vector.shape_cast %17 : vector<8xf32> to vector<8x1xf32>
    %cst_11 = arith.constant 0.001953125 : f32
    %19 = vector.broadcast %cst_11 : f32 to vector<8x1xf32>
    %20 = arith.mulf %18, %19 : vector<8x1xf32>
    %cst_12 = arith.constant 9.99999974E-6 : f32
    %21 = vector.broadcast %cst_12 : f32 to vector<8x1xf32>
    %22 = arith.addf %20, %21 : vector<8x1xf32>
    %23 = math.rsqrt %22 : vector<8x1xf32>
    %24 = arith.mulf %4, %23 : vector<8x1xf32>
    %25 = arith.mulf %11, %24 : vector<8x1xf32>
    %26 = arith.subf %5, %25 : vector<8x1xf32>
    %27 = vector.broadcast %24 : vector<8x1xf32> to vector<8x648xf32>
    %28 = arith.mulf %3, %27 : vector<8x648xf32>
    %29 = vector.broadcast %26 : vector<8x1xf32> to vector<8x648xf32>
    %30 = arith.addf %28, %29 : vector<8x648xf32>
    %cst_13 = arith.constant 0.000000e+00 : f32
    %31 = vector.broadcast %cst_13 : f32 to vector<8x648xf32>
    %32 = arith.maximumf %30, %31 : vector<8x648xf32>
    %cst_14 = arith.constant 0.000000e+00 : f32
    %33 = vector.broadcast %cst_14 : f32 to vector<8x904xf32>
    %c0_15 = arith.constant 0 : index
    %c0_16 = arith.constant 0 : index
    %34 = vector.load %arg6[%c0_15, %c0_16] : memref<8x904xf32, #tpu.memory_space<vmem>>, vector<8x904xf32>
    tpu.vector_store %arg6[%c0_15, %c0_16], %33 {strides = array<i32>} : memref<8x904xf32, #tpu.memory_space<vmem>>, vector<8x904xf32>,
    %35 = vector.broadcast %1 : vector<1x648xf32> to vector<8x648xf32>
    %36 = arith.mulf %32, %35 : vector<8x648xf32>
    %c0_17 = arith.constant 0 : index
    %c128 = arith.constant 128 : index
    %37 = vector.load %arg6[%c0_17, %c128] : memref<8x904xf32, #tpu.memory_space<vmem>>, vector<8x648xf32>
    tpu.vector_store %arg6[%c0_17, %c128], %36 {strides = array<i32>} : memref<8x904xf32, #tpu.memory_space<vmem>>, vector<8x648xf32>,
    %c0_18 = arith.constant 0 : index
    %c109 = arith.constant 109 : index
    %38 = vector.load %arg6[%c0_18, %c109] : memref<8x904xf32, #tpu.memory_space<vmem>>, vector<8x648xf32>
    %c0_19 = arith.constant 0 : index
    %c0_20 = arith.constant 0 : index
    %39 = vector.load %arg7[%c0_19, %c0_20] : memref<72x648xf32, #tpu.memory_space<vmem>>, vector<8x648xf32>
    tpu.vector_store %arg7[%c0_19, %c0_20], %38 {strides = array<i32>} : memref<72x648xf32, #tpu.memory_space<vmem>>, vector<8x648xf32>,
    %c0_21 = arith.constant 0 : index
    %c110 = arith.constant 110 : index
    %40 = vector.load %arg6[%c0_21, %c110] : memref<8x904xf32, #tpu.memory_space<vmem>>, vector<8x648xf32>
    %c8 = arith.constant 8 : index
    %c0_22 = arith.constant 0 : index
    %41 = vector.load %arg7[%c8, %c0_22] : memref<72x648xf32, #tpu.memory_space<vmem>>, vector<8x648xf32>
    tpu.vector_store %arg7[%c8, %c0_22], %40 {strides = array<i32>} : memref<72x648xf32, #tpu.memory_space<vmem>>, vector<8x648xf32>,
    %c0_23 = arith.constant 0 : index
    %c111 = arith.constant 111 : index
    %42 = vector.load %arg6[%c0_23, %c111] : memref<8x904xf32, #tpu.memory_space<vmem>>, vector<8x648xf32>
    %c16 = arith.constant 16 : index
    %c0_24 = arith.constant 0 : index
    %43 = vector.load %arg7[%c16, %c0_24] : memref<72x648xf32, #tpu.memory_space<vmem>>, vector<8x648xf32>
    tpu.vector_store %arg7[%c16, %c0_24], %42 {strides = array<i32>} : memref<72x648xf32, #tpu.memory_space<vmem>>, vector<8x648xf32>,
    %c0_25 = arith.constant 0 : index
    %c127 = arith.constant 127 : index
    %44 = vector.load %arg6[%c0_25, %c127] : memref<8x904xf32, #tpu.memory_space<vmem>>, vector<8x648xf32>
    %c24 = arith.constant 24 : index
    %c0_26 = arith.constant 0 : index
    %45 = vector.load %arg7[%c24, %c0_26] : memref<72x648xf32, #tpu.memory_space<vmem>>, vector<8x648xf32>
    tpu.vector_store %arg7[%c24, %c0_26], %44 {strides = array<i32>} : memref<72x648xf32, #tpu.memory_space<vmem>>, vector<8x648xf32>,
    %c0_27 = arith.constant 0 : index
    %c128_28 = arith.constant 128 : index
    %46 = vector.load %arg6[%c0_27, %c128_28] : memref<8x904xf32, #tpu.memory_space<vmem>>, vector<8x648xf32>
    %c32 = arith.constant 32 : index
    %c0_29 = arith.constant 0 : index
    %47 = vector.load %arg7[%c32, %c0_29] : memref<72x648xf32, #tpu.memory_space<vmem>>, vector<8x648xf32>
    tpu.vector_store %arg7[%c32, %c0_29], %46 {strides = array<i32>} : memref<72x648xf32, #tpu.memory_space<vmem>>, vector<8x648xf32>,
    %c0_30 = arith.constant 0 : index
    %c129 = arith.constant 129 : index
    %48 = vector.load %arg6[%c0_30, %c129] : memref<8x904xf32, #tpu.memory_space<vmem>>, vector<8x648xf32>
    %c40 = arith.constant 40 : index
    %c0_31 = arith.constant 0 : index
    %49 = vector.load %arg7[%c40, %c0_31] : memref<72x648xf32, #tpu.memory_space<vmem>>, vector<8x648xf32>
    tpu.vector_store %arg7[%c40, %c0_31], %48 {strides = array<i32>} : memref<72x648xf32, #tpu.memory_space<vmem>>, vector<8x648xf32>,
    %c0_32 = arith.constant 0 : index
    %c145 = arith.constant 145 : index
    %50 = vector.load %arg6[%c0_32, %c145] : memref<8x904xf32, #tpu.memory_space<vmem>>, vector<8x648xf32>
    %c48 = arith.constant 48 : index
    %c0_33 = arith.constant 0 : index
    %51 = vector.load %arg7[%c48, %c0_33] : memref<72x648xf32, #tpu.memory_space<vmem>>, vector<8x648xf32>
    tpu.vector_store %arg7[%c48, %c0_33], %50 {strides = array<i32>} : memref<72x648xf32, #tpu.memory_space<vmem>>, vector<8x648xf32>,
    %c0_34 = arith.constant 0 : index
    %c146 = arith.constant 146 : index
    %52 = vector.load %arg6[%c0_34, %c146] : memref<8x904xf32, #tpu.memory_space<vmem>>, vector<8x648xf32>
    %c56 = arith.constant 56 : index
    %c0_35 = arith.constant 0 : index
    %53 = vector.load %arg7[%c56, %c0_35] : memref<72x648xf32, #tpu.memory_space<vmem>>, vector<8x648xf32>
    tpu.vector_store %arg7[%c56, %c0_35], %52 {strides = array<i32>} : memref<72x648xf32, #tpu.memory_space<vmem>>, vector<8x648xf32>,
    %c0_36 = arith.constant 0 : index
    %c147 = arith.constant 147 : index
    %54 = vector.load %arg6[%c0_36, %c147] : memref<8x904xf32, #tpu.memory_space<vmem>>, vector<8x648xf32>
    %c64 = arith.constant 64 : index
    %c0_37 = arith.constant 0 : index
    %55 = vector.load %arg7[%c64, %c0_37] : memref<72x648xf32, #tpu.memory_space<vmem>>, vector<8x648xf32>
    tpu.vector_store %arg7[%c64, %c0_37], %54 {strides = array<i32>} : memref<72x648xf32, #tpu.memory_space<vmem>>, vector<8x648xf32>,
    %c0_38 = arith.constant 0 : index
    %c0_39 = arith.constant 0 : index
    %56 = vector.load %arg3[%c0_38, %c0_39] : memref<8x72xf32, #tpu.memory_space<vmem>>, vector<8x72xf32>
    %c0_40 = arith.constant 0 : index
    %c0_41 = arith.constant 0 : index
    %57 = vector.load %arg7[%c0_40, %c0_41] : memref<72x648xf32, #tpu.memory_space<vmem>>, vector<72x648xf32>
    %cst_42 = arith.constant dense<0.000000e+00> : vector<8x648xf32>
    %58 = tpu.matmul %56, %57, %cst_42 {dimension_numbers = #tpu.dot_dimension_numbers<[1], [0], [0], [1], [0, 0, 1, 1], [], []>} : vector<8x72xf32>, vector<72x648xf32>, vector<8x648xf32> -> vector<8x648xf32>
    %c0_43 = arith.constant 0 : index
    %c2 = arith.constant 2 : index
    %59 = vector.load %arg4[%c0_43, %c2] : memref<8x8xf32, #tpu.memory_space<vmem>>, vector<8x1xf32>
    %c0_44 = arith.constant 0 : index
    %c3 = arith.constant 3 : index
    %60 = vector.load %arg4[%c0_44, %c3] : memref<8x8xf32, #tpu.memory_space<vmem>>, vector<8x1xf32>
    %61 = vector.broadcast %1 : vector<1x648xf32> to vector<8x648xf32>
    %62 = arith.mulf %58, %61 : vector<8x648xf32>
    %cst_45 = arith.constant dense<0.000000e+00> : vector<8xf32>
    %63 = vector.multi_reduction <add>, %62, %cst_45 [1] : vector<8x648xf32> to vector<8xf32>
    %64 = vector.shape_cast %63 : vector<8xf32> to vector<8x1xf32>
    %cst_46 = arith.constant 0.001953125 : f32
    %65 = vector.broadcast %cst_46 : f32 to vector<8x1xf32>
    %66 = arith.mulf %64, %65 : vector<8x1xf32>
    %67 = vector.broadcast %66 : vector<8x1xf32> to vector<8x648xf32>
    %68 = arith.subf %58, %67 : vector<8x648xf32>
    %69 = vector.broadcast %1 : vector<1x648xf32> to vector<8x648xf32>
    %70 = arith.mulf %68, %69 : vector<8x648xf32>
    %71 = arith.mulf %70, %70 : vector<8x648xf32>
    %cst_47 = arith.constant dense<0.000000e+00> : vector<8xf32>
    %72 = vector.multi_reduction <add>, %71, %cst_47 [1] : vector<8x648xf32> to vector<8xf32>
    %73 = vector.shape_cast %72 : vector<8xf32> to vector<8x1xf32>
    %cst_48 = arith.constant 0.001953125 : f32
    %74 = vector.broadcast %cst_48 : f32 to vector<8x1xf32>
    %75 = arith.mulf %73, %74 : vector<8x1xf32>
    %cst_49 = arith.constant 9.99999974E-6 : f32
    %76 = vector.broadcast %cst_49 : f32 to vector<8x1xf32>
    %77 = arith.addf %75, %76 : vector<8x1xf32>
    %78 = math.rsqrt %77 : vector<8x1xf32>
    %79 = arith.mulf %59, %78 : vector<8x1xf32>
    %80 = arith.mulf %66, %79 : vector<8x1xf32>
    %81 = arith.subf %60, %80 : vector<8x1xf32>
    %82 = vector.broadcast %79 : vector<8x1xf32> to vector<8x648xf32>
    %83 = arith.mulf %58, %82 : vector<8x648xf32>
    %84 = vector.broadcast %81 : vector<8x1xf32> to vector<8x648xf32>
    %85 = arith.addf %83, %84 : vector<8x648xf32>
    %cst_50 = arith.constant 0.000000e+00 : f32
    %86 = vector.broadcast %cst_50 : f32 to vector<8x648xf32>
    %87 = arith.maximumf %85, %86 : vector<8x648xf32>
    %c0_51 = arith.constant 0 : index
    %c8_52 = arith.constant 8 : index
    %88 = vector.load %arg2[%c0_51, %c8_52] : memref<8x24xf32, #tpu.memory_space<vmem>>, vector<8x8xf32>
    %cst_53 = arith.constant dense<0.000000e+00> : vector<8x648xf32>
    %89 = tpu.matmul %88, %87, %cst_53 {dimension_numbers = #tpu.dot_dimension_numbers<[1], [0], [0], [1], [0, 0, 1, 1], [], []>} : vector<8x8xf32>, vector<8x648xf32>, vector<8x648xf32> -> vector<8x648xf32>
    %c0_54 = arith.constant 0 : index
    %c4 = arith.constant 4 : index
    %90 = vector.load %arg4[%c0_54, %c4] : memref<8x8xf32, #tpu.memory_space<vmem>>, vector<8x1xf32>
    %c0_55 = arith.constant 0 : index
    %c5 = arith.constant 5 : index
    %91 = vector.load %arg4[%c0_55, %c5] : memref<8x8xf32, #tpu.memory_space<vmem>>, vector<8x1xf32>
    %92 = vector.broadcast %1 : vector<1x648xf32> to vector<8x648xf32>
    %93 = arith.mulf %89, %92 : vector<8x648xf32>
    %cst_56 = arith.constant dense<0.000000e+00> : vector<8xf32>
    %94 = vector.multi_reduction <add>, %93, %cst_56 [1] : vector<8x648xf32> to vector<8xf32>
    %95 = vector.shape_cast %94 : vector<8xf32> to vector<8x1xf32>
    %cst_57 = arith.constant 0.001953125 : f32
    %96 = vector.broadcast %cst_57 : f32 to vector<8x1xf32>
    %97 = arith.mulf %95, %96 : vector<8x1xf32>
    %98 = vector.broadcast %97 : vector<8x1xf32> to vector<8x648xf32>
    %99 = arith.subf %89, %98 : vector<8x648xf32>
    %100 = vector.broadcast %1 : vector<1x648xf32> to vector<8x648xf32>
    %101 = arith.mulf %99, %100 : vector<8x648xf32>
    %102 = arith.mulf %101, %101 : vector<8x648xf32>
    %cst_58 = arith.constant dense<0.000000e+00> : vector<8xf32>
    %103 = vector.multi_reduction <add>, %102, %cst_58 [1] : vector<8x648xf32> to vector<8xf32>
    %104 = vector.shape_cast %103 : vector<8xf32> to vector<8x1xf32>
    %cst_59 = arith.constant 0.001953125 : f32
    %105 = vector.broadcast %cst_59 : f32 to vector<8x1xf32>
    %106 = arith.mulf %104, %105 : vector<8x1xf32>
    %cst_60 = arith.constant 9.99999974E-6 : f32
    %107 = vector.broadcast %cst_60 : f32 to vector<8x1xf32>
    %108 = arith.addf %106, %107 : vector<8x1xf32>
    %109 = math.rsqrt %108 : vector<8x1xf32>
    %110 = arith.mulf %90, %109 : vector<8x1xf32>
    %111 = arith.mulf %97, %110 : vector<8x1xf32>
    %112 = arith.subf %91, %111 : vector<8x1xf32>
    %113 = vector.broadcast %110 : vector<8x1xf32> to vector<8x648xf32>
    %114 = arith.mulf %89, %113 : vector<8x648xf32>
    %115 = vector.broadcast %112 : vector<8x1xf32> to vector<8x648xf32>
    %116 = arith.addf %114, %115 : vector<8x648xf32>
    %c0_61 = arith.constant 0 : index
    %c16_62 = arith.constant 16 : index
    %117 = vector.load %arg2[%c0_61, %c16_62] : memref<8x24xf32, #tpu.memory_space<vmem>>, vector<8x8xf32>
    %cst_63 = arith.constant dense<0.000000e+00> : vector<8x648xf32>
    %118 = tpu.matmul %117, %0, %cst_63 {dimension_numbers = #tpu.dot_dimension_numbers<[1], [0], [0], [1], [0, 0, 1, 1], [], []>} : vector<8x8xf32>, vector<8x648xf32>, vector<8x648xf32> -> vector<8x648xf32>
    %c0_64 = arith.constant 0 : index
    %c6 = arith.constant 6 : index
    %119 = vector.load %arg4[%c0_64, %c6] : memref<8x8xf32, #tpu.memory_space<vmem>>, vector<8x1xf32>
    %c0_65 = arith.constant 0 : index
    %c7 = arith.constant 7 : index
    %120 = vector.load %arg4[%c0_65, %c7] : memref<8x8xf32, #tpu.memory_space<vmem>>, vector<8x1xf32>
    %121 = vector.broadcast %1 : vector<1x648xf32> to vector<8x648xf32>
    %122 = arith.mulf %118, %121 : vector<8x648xf32>
    %cst_66 = arith.constant dense<0.000000e+00> : vector<8xf32>
    %123 = vector.multi_reduction <add>, %122, %cst_66 [1] : vector<8x648xf32> to vector<8xf32>
    %124 = vector.shape_cast %123 : vector<8xf32> to vector<8x1xf32>
    %cst_67 = arith.constant 0.001953125 : f32
    %125 = vector.broadcast %cst_67 : f32 to vector<8x1xf32>
    %126 = arith.mulf %124, %125 : vector<8x1xf32>
    %127 = vector.broadcast %126 : vector<8x1xf32> to vector<8x648xf32>
    %128 = arith.subf %118, %127 : vector<8x648xf32>
    %129 = vector.broadcast %1 : vector<1x648xf32> to vector<8x648xf32>
    %130 = arith.mulf %128, %129 : vector<8x648xf32>
    %131 = arith.mulf %130, %130 : vector<8x648xf32>
    %cst_68 = arith.constant dense<0.000000e+00> : vector<8xf32>
    %132 = vector.multi_reduction <add>, %131, %cst_68 [1] : vector<8x648xf32> to vector<8xf32>
    %133 = vector.shape_cast %132 : vector<8xf32> to vector<8x1xf32>
    %cst_69 = arith.constant 0.001953125 : f32
    %134 = vector.broadcast %cst_69 : f32 to vector<8x1xf32>
    %135 = arith.mulf %133, %134 : vector<8x1xf32>
    %cst_70 = arith.constant 9.99999974E-6 : f32
    %136 = vector.broadcast %cst_70 : f32 to vector<8x1xf32>
    %137 = arith.addf %135, %136 : vector<8x1xf32>
    %138 = math.rsqrt %137 : vector<8x1xf32>
    %139 = arith.mulf %119, %138 : vector<8x1xf32>
    %140 = arith.mulf %126, %139 : vector<8x1xf32>
    %141 = arith.subf %120, %140 : vector<8x1xf32>
    %142 = vector.broadcast %139 : vector<8x1xf32> to vector<8x648xf32>
    %143 = arith.mulf %118, %142 : vector<8x648xf32>
    %144 = vector.broadcast %141 : vector<8x1xf32> to vector<8x648xf32>
    %145 = arith.addf %143, %144 : vector<8x648xf32>
    %146 = arith.addf %116, %145 : vector<8x648xf32>
    %cst_71 = arith.constant 0.000000e+00 : f32
    %147 = vector.broadcast %cst_71 : f32 to vector<8x648xf32>
    %148 = arith.maximumf %146, %147 : vector<8x648xf32>
    %c0_72 = arith.constant 0 : index
    %c0_73 = arith.constant 0 : index
    %149 = vector.load %arg5[%c0_72, %c0_73] : memref<8x648xf32, #tpu.memory_space<vmem>>, vector<8x648xf32>
    tpu.vector_store %arg5[%c0_72, %c0_73], %148 {strides = array<i32>} : memref<8x648xf32, #tpu.memory_space<vmem>>, vector<8x648xf32>,
    return
  }
}

</mosaic_0001>

<llo_original>
// kernel: tpu_custom_call.1
$region0: #{tpu_custom_call.1}
  #allocation0 [shape = 'u32[]', space=smem, size = 0x4, offset = 0x4, fixed_abs, tag = 'smem constant byte address 0x4 - core index']
  #allocation1 [shape = 'u32[144,128]{1,0:T(1,128)}', space=vmem, size = 0x12000, scoped, tag = 'internal scratch']
  #allocation2 [shape = 'f32[8,904]{1,0:T(8,128)}', space=vmem, size = 0x8000, scoped, tag = 'scratch operand']
  #allocation3 [shape = 'f32[72,648]{1,0:T(8,128)}', space=vmem, size = 0x36000, scoped, tag = 'scratch operand']
  %s0 = inlined_call_operand.hbm [shape: f32[8,648], index: 0, kind: input, shape index: {}]
  %s1 = inlined_call_operand.hbm [shape: f32[1,648], index: 1, kind: input, shape index: {}]
  %s2 = inlined_call_operand.hbm [shape: f32[8,24], index: 2, kind: input, shape index: {}]
  %s3 = inlined_call_operand.vmem [shape: f32[8,72], index: 3, kind: input, shape index: {}]
  %s4 = inlined_call_operand.hbm [shape: f32[8,8], index: 4, kind: input, shape index: {}]
  %s5 = inlined_call_operand.hbm [shape: f32[8,648], index: 5, kind: output, shape index: {}]
  %s6 = sld [smem:[#allocation0]]
  $region46: #{tpu_custom_call.1} parent=0
    _
  %s8 = ssub.s32 1, %s6
  %s9 = scalar_select 0, %s8, %s6
  $region1: #{tpu_custom_call.1} parent=0
    #allocation4 [shape = 'u8[24576]{0}', space=vmem, size = 0x6000, scoped, tag = 'input window, operand 0, single buffered']
    #allocation5 [shape = 's32[1]{0}', space=sflag, size = 0x4, scoped, tag = 'scoped memory for tpu_custom_call.1']
    #allocation6 [shape = 's32[1]{0}', space=sflag, size = 0x4, scoped, tag = 'scoped memory for tpu_custom_call.1']
    #allocation7 [shape = 'u8[3072]{0}', space=vmem, size = 0xc00, scoped, tag = 'input window, operand 1, single buffered']
    #allocation8 [shape = 's32[1]{0}', space=sflag, size = 0x4, scoped, tag = 'scoped memory for tpu_custom_call.1']
    #allocation9 [shape = 'u8[4096]{0}', space=vmem, size = 0x1000, scoped, tag = 'input window, operand 2, single buffered']
    #allocation10 [shape = 'u8[4096]{0}', space=vmem, size = 0x1000, scoped, tag = 'input window, operand 4, single buffered']
    #allocation11 [shape = 's32[1]{0}', space=sflag, size = 0x4, scoped, tag = 'scoped memory for tpu_custom_call.1']
    #allocation12 [shape = 'u8[24576]{0}', space=vmem, size = 0x6000, scoped, tag = 'output window, operand 0, single buffered']
    %10 = vsyncpa [#allocation5], 0
    %11 = vsyncpa [#allocation8], 0
    %12 = vsyncpa [#allocation11], 0
    %13 = vsyncpa [#allocation6], 0
    // Predicated region
    $region2: #{tpu_custom_call.1} parent=1 // pred_check
      _
    $region3: #{tpu_custom_call.1} parent=1 // pred_check_branch
      %15 = sbr.rel (0) target = $region5
    $region4: #{tpu_custom_call.1} parent=1 // pred_region
      %s17 = ssub.s32 768, 768
      %18 = vsyncadd [#allocation5], %s17
      %s20 = sshll.u32 [#allocation4], 4
      %s21 = int_to_ptr.vmem [resolvable:$true] %s20
      %23 = dma.hbm_to_vmem [thread:$0]  %s0, 768, %s21, [#allocation5]
    $region5: #{tpu_custom_call.1} parent=1 // pred_fallthru
      _
    // Predicated region
    $region6: #{tpu_custom_call.1} parent=1 // pred_check
      _
    $region7: #{tpu_custom_call.1} parent=1 // pred_check_branch
      %25 = sbr.rel (0) target = $region9
    $region8: #{tpu_custom_call.1} parent=1 // pred_region
      %s27 = ssub.s32 96, 96
      %28 = vsyncadd [#allocation8], %s27
      %s30 = sshll.u32 [#allocation7], 4
      %s31 = int_to_ptr.vmem [resolvable:$true] %s30
      %33 = dma.hbm_to_vmem [thread:$0]  %s1, 96, %s31, [#allocation8]
    $region9: #{tpu_custom_call.1} parent=1 // pred_fallthru
      _
    // Predicated region
    $region10: #{tpu_custom_call.1} parent=1 // pred_check
      _
    $region11: #{tpu_custom_call.1} parent=1 // pred_check_branch
      %35 = sbr.rel (0) target = $region13
    $region12: #{tpu_custom_call.1} parent=1 // pred_region
      %s37 = ssub.s32 128, 128
      %38 = vsyncadd [#allocation8], %s37
      %s40 = sshll.u32 [#allocation9], 4
      %s41 = int_to_ptr.vmem [resolvable:$true] %s40
      %43 = dma.hbm_to_vmem [thread:$0]  %s2, 128, %s41, [#allocation8]
    $region13: #{tpu_custom_call.1} parent=1 // pred_fallthru
      _
    // Predicated region
    $region14: #{tpu_custom_call.1} parent=1 // pred_check
      _
    $region15: #{tpu_custom_call.1} parent=1 // pred_check_branch
      %45 = sbr.rel (0) target = $region17
    $region16: #{tpu_custom_call.1} parent=1 // pred_region
      _
    $region17: #{tpu_custom_call.1} parent=1 // pred_fallthru
      _
    // Predicated region
    $region18: #{tpu_custom_call.1} parent=1 // pred_check
      _
    $region19: #{tpu_custom_call.1} parent=1 // pred_check_branch
      %47 = sbr.rel (0) target = $region21
    $region20: #{tpu_custom_call.1} parent=1 // pred_region
      %s49 = ssub.s32 128, 128
      %50 = vsyncadd [#allocation11], %s49
      %s52 = sshll.u32 [#allocation10], 4
      %s53 = int_to_ptr.vmem [resolvable:$true] %s52
      %55 = dma.hbm_to_vmem [thread:$0]  %s4, 128, %s53, [#allocation11]
    $region21: #{tpu_custom_call.1} parent=1 // pred_fallthru
      _
    // Predicated region
    $region22: #{tpu_custom_call.1} parent=1 // pred_check
      _
    $region23: #{tpu_custom_call.1} parent=1 // pred_check_branch
      %57 = sbr.rel (0) target = $region25
    $region24: #{tpu_custom_call.1} parent=1 // pred_region
      %58 = dma.done [#allocation5], 768
    $region25: #{tpu_custom_call.1} parent=1 // pred_fallthru
      _
    // Predicated region
    $region26: #{tpu_custom_call.1} parent=1 // pred_check
      _
    $region27: #{tpu_custom_call.1} parent=1 // pred_check_branch
      %60 = sbr.rel (0) target = $region29
    $region28: #{tpu_custom_call.1} parent=1 // pred_region
      %61 = dma.done [#allocation8], 96
    $region29: #{tpu_custom_call.1} parent=1 // pred_fallthru
      _
    // Predicated region
    $region30: #{tpu_custom_call.1} parent=1 // pred_check
      _
    $region31: #{tpu_custom_call.1} parent=1 // pred_check_branch
      %63 = sbr.rel (0) target = $region33
    $region32: #{tpu_custom_call.1} parent=1 // pred_region
      %64 = dma.done [#allocation8], 128
    $region33: #{tpu_custom_call.1} parent=1 // pred_fallthru
      _
    // Predicated region
    $region34: #{tpu_custom_call.1} parent=1 // pred_check
      _
    $region35: #{tpu_custom_call.1} parent=1 // pred_check_branch
      %66 = sbr.rel (0) target = $region37
    $region36: #{tpu_custom_call.1} parent=1 // pred_region
      %67 = dma.done [#allocation11], 128
    $region37: #{tpu_custom_call.1} parent=1 // pred_fallthru
      _
    %v68 = vld [vmem:[#allocation4] sm:$0xff]
    %v69 = vld [vmem:[#allocation4 + $0x8] sm:$0xff]
    %v70 = vld [vmem:[#allocation4 + $0x10] sm:$0xff]
    %v71 = vld [vmem:[#allocation4 + $0x18] sm:$0xff]
    %v72 = vld [vmem:[#allocation4 + $0x20] sm:$0xff]
    %v73 = vld [vmem:[#allocation4 + $0x28] sm:$0xff]
    %v74 = vld [vmem:[#allocation7] sm:$0x3f]
    %v75 = vld [vmem:[#allocation9] sm:$0xff]
    %vm76 = vcmask 64512
    %v78 = vsel %vm76, %v75, 0
    %80 = vmatprep.subr.mxu0 %v69
    %81 = vmatpush1.msra.mxu0 %v68
    %82 = vmatprep.subr.mxu0 0.0
    %83 = vmatpush1.msra.mxu0 0.0
    %84 = vmatprep.subr.mxu0 0.0
    %85 = vmatpush1.msra.mxu0 0.0
    %86 = vmatprep.subr.mxu0 0.0
    %87 = vmatpush1.msra.mxu0 0.0
    %88 = vmatprep.subr.mxu0 0.0
    %89 = vmatpush1.msra.mxu0 0.0
    %90 = vmatprep.subr.mxu0 0.0
    %91 = vmatpush1.msra.mxu0 0.0
    %92 = vmatprep.subr.mxu0 0.0
    %93 = vmatpush1.msra.mxu0 0.0
    %94 = vmatprep.subr.mxu0 0.0
    %95 = vmatpush1.msra.mxu0 0.0
    %96 = vmatprep.subr.mxu0 0.0
    %97 = vmatpush1.msra.mxu0 0.0
    %98 = vmatprep.subr.mxu0 0.0
    %99 = vmatpush1.msra.mxu0 0.0
    %100 = vmatprep.subr.mxu0 0.0
    %101 = vmatpush1.msra.mxu0 0.0
    %102 = vmatprep.subr.mxu0 0.0
    %103 = vmatpush1.msra.mxu0 0.0
    %104 = vmatprep.subr.mxu0 0.0
    %105 = vmatpush1.msra.mxu0 0.0
    %106 = vmatprep.subr.mxu0 0.0
    %107 = vmatpush1.msra.mxu0 0.0
    %108 = vmatprep.subr.mxu0 0.0
    %109 = vmatpush1.msra.mxu0 0.0
    %110 = vmatprep.subr.mxu0 0.0
    %111 = vmatpush1.msra.mxu0 0.0
    %112 = vmatprep.subr.mxu0 0.0
    %113 = vmatpush1.msra.mxu0 0.0
    %114 = vmatprep.subr.mxu0 0.0
    %115 = vmatpush1.msra.mxu0 0.0
    %116 = vmatprep.subr.mxu0 0.0
    %117 = vmatpush1.msra.mxu0 0.0
    %118 = vmatprep.subr.mxu0 0.0
    %119 = vmatpush1.msra.mxu0 0.0
    %120 = vmatprep.subr.mxu0 0.0
    %121 = vmatpush1.msra.mxu0 0.0
    %122 = vmatprep.subr.mxu0 0.0
    %123 = vmatpush1.msra.mxu0 0.0
    %124 = vmatprep.subr.mxu0 0.0
    %125 = vmatpush1.msra.mxu0 0.0
    %126 = vmatprep.subr.mxu0 0.0
    %127 = vmatpush1.msra.mxu0 0.0
    %128 = vmatprep.subr.mxu0 0.0
    %129 = vmatpush1.msra.mxu0 0.0
    %130 = vmatprep.subr.mxu0 0.0
    %131 = vmatpush1.msra.mxu0 0.0
    %132 = vmatprep.subr.mxu0 0.0
    %133 = vmatpush1.msra.mxu0 0.0
    %134 = vmatprep.subr.mxu0 0.0
    %135 = vmatpush1.msra.mxu0 0.0
    %136 = vmatprep.subr.mxu0 0.0
    %137 = vmatpush1.msra.mxu0 0.0
    %138 = vmatprep.subr.mxu0 0.0
    %139 = vmatpush1.msra.mxu0 0.0
    %140 = vmatprep.subr.mxu0 0.0
    %141 = vmatpush1.msra.mxu0 0.0
    %142 = vmatprep.subr.mxu0 0.0
    %143 = vmatpush1.msra.mxu0 0.0
    %144 = vmatprep.mubr.f32.mxu0 0.0
    %145 = vmatmul.mubr.f32.gmra.mrb[0].mxu0 %v78
    %v146 = vpop.f32.mrb[0].mxu0
    %v147 = vadd.f32 0.0, %v146
    %v148 = vpop.f32.mrb[0].mxu0
    %v149 = vadd.f32 0.0, %v148
    %150 = vdwg.mxu0
    %151 = vmatprep.subr.mxu0 %v71
    %152 = vmatpush1.msra.mxu0 %v70
    %153 = vmatprep.subr.mxu0 0.0
    %154 = vmatpush1.msra.mxu0 0.0
    %155 = vmatprep.subr.mxu0 0.0
    %156 = vmatpush1.msra.mxu0 0.0
    %157 = vmatprep.subr.mxu0 0.0
    %158 = vmatpush1.msra.mxu0 0.0
    %159 = vmatprep.subr.mxu0 0.0
    %160 = vmatpush1.msra.mxu0 0.0
    %161 = vmatprep.subr.mxu0 0.0
    %162 = vmatpush1.msra.mxu0 0.0
    %163 = vmatprep.subr.mxu0 0.0
    %164 = vmatpush1.msra.mxu0 0.0
    %165 = vmatprep.subr.mxu0 0.0
    %166 = vmatpush1.msra.mxu0 0.0
    %167 = vmatprep.subr.mxu0 0.0
    %168 = vmatpush1.msra.mxu0 0.0
    %169 = vmatprep.subr.mxu0 0.0
    %170 = vmatpush1.msra.mxu0 0.0
    %171 = vmatprep.subr.mxu0 0.0
    %172 = vmatpush1.msra.mxu0 0.0
    %173 = vmatprep.subr.mxu0 0.0
    %174 = vmatpush1.msra.mxu0 0.0
    %175 = vmatprep.subr.mxu0 0.0
    %176 = vmatpush1.msra.mxu0 0.0
    %177 = vmatprep.subr.mxu0 0.0
    %178 = vmatpush1.msra.mxu0 0.0
    %179 = vmatprep.subr.mxu0 0.0
    %180 = vmatpush1.msra.mxu0 0.0
    %181 = vmatprep.subr.mxu0 0.0
    %182 = vmatpush1.msra.mxu0 0.0
    %183 = vmatprep.subr.mxu0 0.0
    %184 = vmatpush1.msra.mxu0 0.0
    %185 = vmatprep.subr.mxu0 0.0
    %186 = vmatpush1.msra.mxu0 0.0
    %187 = vmatprep.subr.mxu0 0.0
    %188 = vmatpush1.msra.mxu0 0.0
    %189 = vmatprep.subr.mxu0 0.0
    %190 = vmatpush1.msra.mxu0 0.0
    %191 = vmatprep.subr.mxu0 0.0
    %192 = vmatpush1.msra.mxu0 0.0
    %193 = vmatprep.subr.mxu0 0.0
    %194 = vmatpush1.msra.mxu0 0.0
    %195 = vmatprep.subr.mxu0 0.0
    %196 = vmatpush1.msra.mxu0 0.0
    %197 = vmatprep.subr.mxu0 0.0
    %198 = vmatpush1.msra.mxu0 0.0
    %199 = vmatprep.subr.mxu0 0.0
    %200 = vmatpush1.msra.mxu0 0.0
    %201 = vmatprep.subr.mxu0 0.0
    %202 = vmatpush1.msra.mxu0 0.0
    %203 = vmatprep.subr.mxu0 0.0
    %204 = vmatpush1.msra.mxu0 0.0
    %205 = vmatprep.subr.mxu0 0.0
    %206 = vmatpush1.msra.mxu0 0.0
    %207 = vmatprep.subr.mxu0 0.0
    %208 = vmatpush1.msra.mxu0 0.0
    %209 = vmatprep.subr.mxu0 0.0
    %210 = vmatpush1.msra.mxu0 0.0
    %211 = vmatprep.subr.mxu0 0.0
    %212 = vmatpush1.msra.mxu0 0.0
    %213 = vmatprep.subr.mxu0 0.0
    %214 = vmatpush1.msra.mxu0 0.0
    %215 = vmatprep.mubr.f32.mxu0 0.0
    %216 = vmatmul.mubr.f32.gmra.mrb[0].mxu0 %v78
    %v217 = vpop.f32.mrb[0].mxu0
    %v218 = vadd.f32 0.0, %v217
    %v219 = vpop.f32.mrb[0].mxu0
    %v220 = vadd.f32 0.0, %v219
    %221 = vdwg.mxu0
    %222 = vmatprep.subr.mxu0 %v73
    %223 = vmatpush1.msra.mxu0 %v72
    %224 = vmatprep.subr.mxu0 0.0
    %225 = vmatpush1.msra.mxu0 0.0
    %226 = vmatprep.subr.mxu0 0.0
    %227 = vmatpush1.msra.mxu0 0.0
    %228 = vmatprep.subr.mxu0 0.0
    %229 = vmatpush1.msra.mxu0 0.0
    %230 = vmatprep.subr.mxu0 0.0
    %231 = vmatpush1.msra.mxu0 0.0
    %232 = vmatprep.subr.mxu0 0.0
    %233 = vmatpush1.msra.mxu0 0.0
    %234 = vmatprep.subr.mxu0 0.0
    %235 = vmatpush1.msra.mxu0 0.0
    %236 = vmatprep.subr.mxu0 0.0
    %237 = vmatpush1.msra.mxu0 0.0
    %238 = vmatprep.subr.mxu0 0.0
    %239 = vmatpush1.msra.mxu0 0.0
    %240 = vmatprep.subr.mxu0 0.0
    %241 = vmatpush1.msra.mxu0 0.0
    %242 = vmatprep.subr.mxu0 0.0
    %243 = vmatpush1.msra.mxu0 0.0
    %244 = vmatprep.subr.mxu0 0.0
    %245 = vmatpush1.msra.mxu0 0.0
    %246 = vmatprep.subr.mxu0 0.0
    %247 = vmatpush1.msra.mxu0 0.0
    %248 = vmatprep.subr.mxu0 0.0
    %249 = vmatpush1.msra.mxu0 0.0
    %250 = vmatprep.subr.mxu0 0.0
    %251 = vmatpush1.msra.mxu0 0.0
    %252 = vmatprep.subr.mxu0 0.0
    %253 = vmatpush1.msra.mxu0 0.0
    %254 = vmatprep.subr.mxu0 0.0
    %255 = vmatpush1.msra.mxu0 0.0
    %256 = vmatprep.subr.mxu0 0.0
    %257 = vmatpush1.msra.mxu0 0.0
    %258 = vmatprep.subr.mxu0 0.0
    %259 = vmatpush1.msra.mxu0 0.0
    %260 = vmatprep.subr.mxu0 0.0
    %261 = vmatpush1.msra.mxu0 0.0
    %262 = vmatprep.subr.mxu0 0.0
    %263 = vmatpush1.msra.mxu0 0.0
    %264 = vmatprep.subr.mxu0 0.0
    %265 = vmatpush1.msra.mxu0 0.0
    %266 = vmatprep.subr.mxu0 0.0
    %267 = vmatpush1.msra.mxu0 0.0
    %268 = vmatprep.subr.mxu0 0.0
    %269 = vmatpush1.msra.mxu0 0.0
    %270 = vmatprep.subr.mxu0 0.0
    %271 = vmatpush1.msra.mxu0 0.0
    %272 = vmatprep.subr.mxu0 0.0
    %273 = vmatpush1.msra.mxu0 0.0
    %274 = vmatprep.subr.mxu0 0.0
    %275 = vmatpush1.msra.mxu0 0.0
    %276 = vmatprep.subr.mxu0 0.0
    %277 = vmatpush1.msra.mxu0 0.0
    %278 = vmatprep.subr.mxu0 0.0
    %279 = vmatpush1.msra.mxu0 0.0
    %280 = vmatprep.subr.mxu0 0.0
    %281 = vmatpush1.msra.mxu0 0.0
    %282 = vmatprep.subr.mxu0 0.0
    %283 = vmatpush1.msra.mxu0 0.0
    %284 = vmatprep.subr.mxu0 0.0
    %285 = vmatpush1.msra.mxu0 0.0
    %286 = vmatprep.mubr.f32.mxu0 0.0
    %287 = vmatmul.mubr.f32.gmra.mrb[0].mxu0 %v78
    %v288 = vpop.f32.mrb[0].mxu0
    %v289 = vadd.f32 0.0, %v288
    %v290 = vpop.f32.mrb[0].mxu0
    %v291 = vadd.f32 0.0, %v290
    %292 = vdwg.mxu0
    %v293 = vld [vmem:[#allocation10] sm:$0xff]
    %v295 = vlaneseq
    %v296 = vshrl.u32 %v295, 7
    %v297 = vsub.s32 0, %v296
    %v298 = vrot.slane %v74, %v297
    %v299 = vlaneseq
    %v300 = vshrl.u32 %v299, 7
    %v301 = vsub.s32 1, %v300
    %v302 = vrot.slane %v74, %v301
    %v303 = vlaneseq
    %v304 = vshrl.u32 %v303, 7
    %v305 = vsub.s32 2, %v304
    %v306 = vrot.slane %v74, %v305
    %v307 = vlaneseq
    %v308 = vshrl.u32 %v307, 7
    %v309 = vsub.s32 3, %v308
    %v310 = vrot.slane %v74, %v309
    %v311 = vlaneseq
    %v312 = vshrl.u32 %v311, 7
    %v313 = vsub.s32 4, %v312
    %v314 = vrot.slane %v74, %v313
    %v315 = vlaneseq
    %v316 = vshrl.u32 %v315, 7
    %v317 = vsub.s32 5, %v316
    %v318 = vrot.slane %v74, %v317
    %v325 = vmul.f32 %v147, %v298
    %v326 = vmul.f32 %v149, %v302
    %v327 = vmul.f32 %v218, %v306
    %v328 = vmul.f32 %v220, %v310
    %v329 = vmul.f32 %v289, %v314
    %v330 = vmul.f32 %v291, %v318
    %v331 = vadd.f32 %v325, %v326
    %v332 = vadd.f32 %v331, %v327
    %v333 = vadd.f32 %v332, %v328
    %v334 = vadd.f32 %v333, %v329
    %v335 = vsel %vm76, %v330, 0.0
    %v336 = vadd.f32 %v334, %v335
    %337 = vadd.xlane.f32.xlu0 %v336
    %v338 = vpop.xlane.xlu0 %337
    %v339 = vmul.f32 %v338, 0.001953125
    %v340 = vsub.f32 %v147, %v339
    %v341 = vsub.f32 %v149, %v339
    %v342 = vsub.f32 %v218, %v339
    %v343 = vsub.f32 %v220, %v339
    %v344 = vsub.f32 %v289, %v339
    %v345 = vsub.f32 %v291, %v339
    %v346 = vmul.f32 %v340, %v298
    %v347 = vmul.f32 %v341, %v302
    %v348 = vmul.f32 %v342, %v306
    %v349 = vmul.f32 %v343, %v310
    %v350 = vmul.f32 %v344, %v314
    %v351 = vmul.f32 %v345, %v318
    %v352 = vmul.f32 %v346, %v346
    %v353 = vmul.f32 %v347, %v347
    %v354 = vmul.f32 %v348, %v348
    %v355 = vmul.f32 %v349, %v349
    %v356 = vmul.f32 %v350, %v350
    %v357 = vmul.f32 %v351, %v351
    %v358 = vadd.f32 %v352, %v353
    %v359 = vadd.f32 %v358, %v354
    %v360 = vadd.f32 %v359, %v355
    %v361 = vadd.f32 %v360, %v356
    %v362 = vsel %vm76, %v357, 0.0
    %v363 = vadd.f32 %v361, %v362
    %364 = vadd.xlane.f32.xlu0 %v363
    %v365 = vpop.xlane.xlu0 %364
    %v366 = vmul.f32 %v365, 0.001953125
    %v367 = vadd.f32 %v366, 1e-05
    %v368 = vrsqrt.pop %v367
    %v369 = vmul.f32 %v293, %v368
    %v370 = vmul.f32 %v339, %v369
    %372 = vrot.lane.b32.xlu0 %v370, 1
    %v373 = vpop.permute.xlu0 %372
    %v375 = vsub.f32 %v293, %v373
    %377 = vset.pattern.permute.xlu0 0
    %378 = vperm.xlu0 %377, %v369
    %v379 = vpop.permute.xlu0 %378
    %v381 = vmul.f32 %v147, %v379
    %v382 = vmul.f32 %v149, %v379
    %v383 = vmul.f32 %v218, %v379
    %v384 = vmul.f32 %v220, %v379
    %v385 = vmul.f32 %v289, %v379
    %v386 = vmul.f32 %v291, %v379
    %388 = vset.pattern.permute.xlu0 1
    %389 = vperm.xlu0 %388, %v375
    %v390 = vpop.permute.xlu0 %389
    %v392 = vadd.f32 %v381, %v390
    %v393 = vadd.f32 %v382, %v390
    %v394 = vadd.f32 %v383, %v390
    %v395 = vadd.f32 %v384, %v390
    %v396 = vadd.f32 %v385, %v390
    %v397 = vadd.f32 %v386, %v390
    %v398 = vmax.f32 %v392, 0.0
    %v399 = vmax.f32 %v393, 0.0
    %v400 = vmax.f32 %v394, 0.0
    %v401 = vmax.f32 %v395, 0.0
    %v402 = vmax.f32 %v396, 0.0
    %v403 = vmax.f32 %v397, 0.0
    %404 = vst [vmem:[#allocation2] sm:$0xff] 0.0
    %405 = vst [vmem:[#allocation2 + $0x8] sm:$0xff] 0.0
    %406 = vst [vmem:[#allocation2 + $0x10] sm:$0xff] 0.0
    %407 = vst [vmem:[#allocation2 + $0x18] sm:$0xff] 0.0
    %408 = vst [vmem:[#allocation2 + $0x20] sm:$0xff] 0.0
    %409 = vst [vmem:[#allocation2 + $0x28] sm:$0xff] 0.0
    %410 = vst [vmem:[#allocation2 + $0x30] sm:$0xff] 0.0
    %411 = vst.msk [vmem:[#allocation2 + $0x38] sm:$0xff] %vm76, 0.0
    %v412 = vmul.f32 %v398, %v298
    %v413 = vmul.f32 %v399, %v302
    %v414 = vmul.f32 %v400, %v306
    %v415 = vmul.f32 %v401, %v310
    %v416 = vmul.f32 %v402, %v314
    %v417 = vmul.f32 %v403, %v318
    %418 = vst [vmem:[#allocation2 + $0x8] sm:$0xff] %v412
    %419 = vst [vmem:[#allocation2 + $0x10] sm:$0xff] %v413
    %420 = vst [vmem:[#allocation2 + $0x18] sm:$0xff] %v414
    %421 = vst [vmem:[#allocation2 + $0x20] sm:$0xff] %v415
    %422 = vst [vmem:[#allocation2 + $0x28] sm:$0xff] %v416
    %423 = vst.msk [vmem:[#allocation2 + $0x30] sm:$0xff] %vm76, %v417
    %v424 = vld [vmem:[#allocation2] sm:$0xff]
    %v425 = vld [vmem:[#allocation2 + $0x8] sm:$0xff]
    %v426 = vld [vmem:[#allocation2 + $0x10] sm:$0xff]
    %v427 = vld [vmem:[#allocation2 + $0x18] sm:$0xff]
    %v428 = vld [vmem:[#allocation2 + $0x20] sm:$0xff]
    %v429 = vld [vmem:[#allocation2 + $0x28] sm:$0xff]
    %436 = vrot.lane.b32.xlu0 %v424, 19
    %v437 = vpop.permute.xlu0 %436
    %438 = vrot.lane.b32.xlu0 %v425, 19
    %v439 = vpop.permute.xlu0 %438
    %440 = vrot.lane.b32.xlu0 %v426, 19
    %v441 = vpop.permute.xlu0 %440
    %442 = vrot.lane.b32.xlu0 %v427, 19
    %v443 = vpop.permute.xlu0 %442
    %444 = vrot.lane.b32.xlu0 %v428, 19
    %v445 = vpop.permute.xlu0 %444
    %446 = vrot.lane.b32.xlu0 %v429, 19
    %v447 = vpop.permute.xlu0 %446
    %vm448 = vcmask 154624
    %v449 = vsel %vm448, %v437, %v439
    %v450 = vsel %vm448, %v439, %v441
    %v451 = vsel %vm448, %v441, %v443
    %v452 = vsel %vm448, %v443, %v445
    %v453 = vsel %vm448, %v445, %v447
    %460 = vst [vmem:[#allocation3] sm:$0xff] %v449
    %461 = vst [vmem:[#allocation3 + $0x8] sm:$0xff] %v450
    %462 = vst [vmem:[#allocation3 + $0x10] sm:$0xff] %v451
    %463 = vst [vmem:[#allocation3 + $0x18] sm:$0xff] %v452
    %464 = vst [vmem:[#allocation3 + $0x20] sm:$0xff] %v453
    %465 = vst.msk [vmem:[#allocation3 + $0x28] sm:$0xff] %vm76, %v447
    %v466 = vld [vmem:[#allocation2] sm:$0xff]
    %v467 = vld [vmem:[#allocation2 + $0x8] sm:$0xff]
    %v468 = vld [vmem:[#allocation2 + $0x10] sm:$0xff]
    %v469 = vld [vmem:[#allocation2 + $0x18] sm:$0xff]
    %v470 = vld [vmem:[#allocation2 + $0x20] sm:$0xff]
    %v471 = vld [vmem:[#allocation2 + $0x28] sm:$0xff]
    %478 = vrot.lane.b32.xlu0 %v466, 18
    %v479 = vpop.permute.xlu0 %478
    %480 = vrot.lane.b32.xlu0 %v467, 18
    %v481 = vpop.permute.xlu0 %480
    %482 = vrot.lane.b32.xlu0 %v468, 18
    %v483 = vpop.permute.xlu0 %482
    %484 = vrot.lane.b32.xlu0 %v469, 18
    %v485 = vpop.permute.xlu0 %484
    %486 = vrot.lane.b32.xlu0 %v470, 18
    %v487 = vpop.permute.xlu0 %486
    %488 = vrot.lane.b32.xlu0 %v471, 18
    %v489 = vpop.permute.xlu0 %488
    %vm490 = vcmask 146432
    %v491 = vsel %vm490, %v479, %v481
    %v492 = vsel %vm490, %v481, %v483
    %v493 = vsel %vm490, %v483, %v485
    %v494 = vsel %vm490, %v485, %v487
    %v495 = vsel %vm490, %v487, %v489
    %502 = vst [vmem:[#allocation3 + $0x30] sm:$0xff] %v491
    %503 = vst [vmem:[#allocation3 + $0x38] sm:$0xff] %v492
    %504 = vst [vmem:[#allocation3 + $0x40] sm:$0xff] %v493
    %505 = vst [vmem:[#allocation3 + $0x48] sm:$0xff] %v494
    %506 = vst [vmem:[#allocation3 + $0x50] sm:$0xff] %v495
    %507 = vst.msk [vmem:[#allocation3 + $0x58] sm:$0xff] %vm76, %v489
    %v508 = vld [vmem:[#allocation2] sm:$0xff]
    %v509 = vld [vmem:[#allocation2 + $0x8] sm:$0xff]
    %v510 = vld [vmem:[#allocation2 + $0x10] sm:$0xff]
    %v511 = vld [vmem:[#allocation2 + $0x18] sm:$0xff]
    %v512 = vld [vmem:[#allocation2 + $0x20] sm:$0xff]
    %v513 = vld [vmem:[#allocation2 + $0x28] sm:$0xff]
    %520 = vrot.lane.b32.xlu0 %v508, 17
    %v521 = vpop.permute.xlu0 %520
    %522 = vrot.lane.b32.xlu0 %v509, 17
    %v523 = vpop.permute.xlu0 %522
    %524 = vrot.lane.b32.xlu0 %v510, 17
    %v525 = vpop.permute.xlu0 %524
    %526 = vrot.lane.b32.xlu0 %v511, 17
    %v527 = vpop.permute.xlu0 %526
    %528 = vrot.lane.b32.xlu0 %v512, 17
    %v529 = vpop.permute.xlu0 %528
    %530 = vrot.lane.b32.xlu0 %v513, 17
    %v531 = vpop.permute.xlu0 %530
    %vm532 = vcmask 138240
    %v533 = vsel %vm532, %v521, %v523
    %v534 = vsel %vm532, %v523, %v525
    %v535 = vsel %vm532, %v525, %v527
    %v536 = vsel %vm532, %v527, %v529
    %v537 = vsel %vm532, %v529, %v531
    %544 = vst [vmem:[#allocation3 + $0x60] sm:$0xff] %v533
    %545 = vst [vmem:[#allocation3 + $0x68] sm:$0xff] %v534
    %546 = vst [vmem:[#allocation3 + $0x70] sm:$0xff] %v535
    %547 = vst [vmem:[#allocation3 + $0x78] sm:$0xff] %v536
    %548 = vst [vmem:[#allocation3 + $0x80] sm:$0xff] %v537
    %549 = vst.msk [vmem:[#allocation3 + $0x88] sm:$0xff] %vm76, %v531
    %v550 = vld [vmem:[#allocation2] sm:$0xff]
    %v551 = vld [vmem:[#allocation2 + $0x8] sm:$0xff]
    %v552 = vld [vmem:[#allocation2 + $0x10] sm:$0xff]
    %v553 = vld [vmem:[#allocation2 + $0x18] sm:$0xff]
    %v554 = vld [vmem:[#allocation2 + $0x20] sm:$0xff]
    %v555 = vld [vmem:[#allocation2 + $0x28] sm:$0xff]
    %v556 = vld [vmem:[#allocation2 + $0x30] sm:$0xff]
    %564 = vrot.lane.b32.xlu0 %v550, 1
    %v565 = vpop.permute.xlu0 %564
    %566 = vrot.lane.b32.xlu0 %v551, 1
    %v567 = vpop.permute.xlu0 %566
    %568 = vrot.lane.b32.xlu0 %v552, 1
    %v569 = vpop.permute.xlu0 %568
    %570 = vrot.lane.b32.xlu0 %v553, 1
    %v571 = vpop.permute.xlu0 %570
    %572 = vrot.lane.b32.xlu0 %v554, 1
    %v573 = vpop.permute.xlu0 %572
    %574 = vrot.lane.b32.xlu0 %v555, 1
    %v575 = vpop.permute.xlu0 %574
    %576 = vrot.lane.b32.xlu0 %v556, 1
    %v577 = vpop.permute.xlu0 %576
    %vm578 = vcmask 7168
    %v579 = vsel %vm578, %v565, %v567
    %v580 = vsel %vm578, %v567, %v569
    %v581 = vsel %vm578, %v569, %v571
    %v582 = vsel %vm578, %v571, %v573
    %v583 = vsel %vm578, %v573, %v575
    %v584 = vsel %vm578, %v575, %v577
    %591 = vst [vmem:[#allocation3 + $0x90] sm:$0xff] %v579
    %592 = vst [vmem:[#allocation3 + $0x98] sm:$0xff] %v580
    %593 = vst [vmem:[#allocation3 + $0xa0] sm:$0xff] %v581
    %594 = vst [vmem:[#allocation3 + $0xa8] sm:$0xff] %v582
    %595 = vst [vmem:[#allocation3 + $0xb0] sm:$0xff] %v583
    %596 = vst.msk [vmem:[#allocation3 + $0xb8] sm:$0xff] %vm76, %v584
    %v597 = vld [vmem:[#allocation2 + $0x8] sm:$0xff]
    %v598 = vld [vmem:[#allocation2 + $0x10] sm:$0xff]
    %v599 = vld [vmem:[#allocation2 + $0x18] sm:$0xff]
    %v600 = vld [vmem:[#allocation2 + $0x20] sm:$0xff]
    %v601 = vld [vmem:[#allocation2 + $0x28] sm:$0xff]
    %v602 = vld [vmem:[#allocation2 + $0x30] sm:$0xff]
    %603 = vst [vmem:[#allocation3 + $0xc0] sm:$0xff] %v597
    %604 = vst [vmem:[#allocation3 + $0xc8] sm:$0xff] %v598
    %605 = vst [vmem:[#allocation3 + $0xd0] sm:$0xff] %v599
    %606 = vst [vmem:[#allocation3 + $0xd8] sm:$0xff] %v600
    %607 = vst [vmem:[#allocation3 + $0xe0] sm:$0xff] %v601
    %608 = vst.msk [vmem:[#allocation3 + $0xe8] sm:$0xff] %vm76, %v602
    %v609 = vld [vmem:[#allocation2 + $0x8] sm:$0xff]
    %v610 = vld [vmem:[#allocation2 + $0x10] sm:$0xff]
    %v611 = vld [vmem:[#allocation2 + $0x18] sm:$0xff]
    %v612 = vld [vmem:[#allocation2 + $0x20] sm:$0xff]
    %v613 = vld [vmem:[#allocation2 + $0x28] sm:$0xff]
    %v614 = vld [vmem:[#allocation2 + $0x30] sm:$0xff]
    %621 = vrot.lane.b32.xlu0 %v609, 127
    %v622 = vpop.permute.xlu0 %621
    %623 = vrot.lane.b32.xlu0 %v610, 127
    %v624 = vpop.permute.xlu0 %623
    %625 = vrot.lane.b32.xlu0 %v611, 127
    %v626 = vpop.permute.xlu0 %625
    %627 = vrot.lane.b32.xlu0 %v612, 127
    %v628 = vpop.permute.xlu0 %627
    %629 = vrot.lane.b32.xlu0 %v613, 127
    %v630 = vpop.permute.xlu0 %629
    %631 = vrot.lane.b32.xlu0 %v614, 127
    %v632 = vpop.permute.xlu0 %631
    %vm633 = vcmask 1039360
    %v634 = vsel %vm633, %v622, %v624
    %v635 = vsel %vm633, %v624, %v626
    %v636 = vsel %vm633, %v626, %v628
    %v637 = vsel %vm633, %v628, %v630
    %v638 = vsel %vm633, %v630, %v632
    %645 = vst [vmem:[#allocation3 + $0xf0] sm:$0xff] %v634
    %646 = vst [vmem:[#allocation3 + $0xf8] sm:$0xff] %v635
    %647 = vst [vmem:[#allocation3 + $0x100] sm:$0xff] %v636
    %648 = vst [vmem:[#allocation3 + $0x108] sm:$0xff] %v637
    %649 = vst [vmem:[#allocation3 + $0x110] sm:$0xff] %v638
    %650 = vst.msk [vmem:[#allocation3 + $0x118] sm:$0xff] %vm76, %v632
    %v651 = vld [vmem:[#allocation2 + $0x8] sm:$0xff]
    %v652 = vld [vmem:[#allocation2 + $0x10] sm:$0xff]
    %v653 = vld [vmem:[#allocation2 + $0x18] sm:$0xff]
    %v654 = vld [vmem:[#allocation2 + $0x20] sm:$0xff]
    %v655 = vld [vmem:[#allocation2 + $0x28] sm:$0xff]
    %v656 = vld [vmem:[#allocation2 + $0x30] sm:$0xff]
    %663 = vrot.lane.b32.xlu0 %v651, 111
    %v664 = vpop.permute.xlu0 %663
    %665 = vrot.lane.b32.xlu0 %v652, 111
    %v666 = vpop.permute.xlu0 %665
    %667 = vrot.lane.b32.xlu0 %v653, 111
    %v668 = vpop.permute.xlu0 %667
    %669 = vrot.lane.b32.xlu0 %v654, 111
    %v670 = vpop.permute.xlu0 %669
    %671 = vrot.lane.b32.xlu0 %v655, 111
    %v672 = vpop.permute.xlu0 %671
    %673 = vrot.lane.b32.xlu0 %v656, 111
    %v674 = vpop.permute.xlu0 %673
    %vm675 = vcmask 908288
    %v676 = vsel %vm675, %v664, %v666
    %v677 = vsel %vm675, %v666, %v668
    %v678 = vsel %vm675, %v668, %v670
    %v679 = vsel %vm675, %v670, %v672
    %v680 = vsel %vm675, %v672, %v674
    %687 = vst [vmem:[#allocation3 + $0x120] sm:$0xff] %v676
    %688 = vst [vmem:[#allocation3 + $0x128] sm:$0xff] %v677
    %689 = vst [vmem:[#allocation3 + $0x130] sm:$0xff] %v678
    %690 = vst [vmem:[#allocation3 + $0x138] sm:$0xff] %v679
    %691 = vst [vmem:[#allocation3 + $0x140] sm:$0xff] %v680
    %692 = vst.msk [vmem:[#allocation3 + $0x148] sm:$0xff] %vm76, %v674
    %v693 = vld [vmem:[#allocation2 + $0x8] sm:$0xff]
    %v694 = vld [vmem:[#allocation2 + $0x10] sm:$0xff]
    %v695 = vld [vmem:[#allocation2 + $0x18] sm:$0xff]
    %v696 = vld [vmem:[#allocation2 + $0x20] sm:$0xff]
    %v697 = vld [vmem:[#allocation2 + $0x28] sm:$0xff]
    %v698 = vld [vmem:[#allocation2 + $0x30] sm:$0xff]
    %705 = vrot.lane.b32.xlu0 %v693, 110
    %v706 = vpop.permute.xlu0 %705
    %707 = vrot.lane.b32.xlu0 %v694, 110
    %v708 = vpop.permute.xlu0 %707
    %709 = vrot.lane.b32.xlu0 %v695, 110
    %v710 = vpop.permute.xlu0 %709
    %711 = vrot.lane.b32.xlu0 %v696, 110
    %v712 = vpop.permute.xlu0 %711
    %713 = vrot.lane.b32.xlu0 %v697, 110
    %v714 = vpop.permute.xlu0 %713
    %715 = vrot.lane.b32.xlu0 %v698, 110
    %v716 = vpop.permute.xlu0 %715
    %vm717 = vcmask 900096
    %v718 = vsel %vm717, %v706, %v708
    %v719 = vsel %vm717, %v708, %v710
    %v720 = vsel %vm717, %v710, %v712
    %v721 = vsel %vm717, %v712, %v714
    %v722 = vsel %vm717, %v714, %v716
    %729 = vst [vmem:[#allocation3 + $0x150] sm:$0xff] %v718
    %730 = vst [vmem:[#allocation3 + $0x158] sm:$0xff] %v719
    %731 = vst [vmem:[#allocation3 + $0x160] sm:$0xff] %v720
    %732 = vst [vmem:[#allocation3 + $0x168] sm:$0xff] %v721
    %733 = vst [vmem:[#allocation3 + $0x170] sm:$0xff] %v722
    %734 = vst.msk [vmem:[#allocation3 + $0x178] sm:$0xff] %vm76, %v716
    %v735 = vld [vmem:[#allocation2 + $0x8] sm:$0xff]
    %v736 = vld [vmem:[#allocation2 + $0x10] sm:$0xff]
    %v737 = vld [vmem:[#allocation2 + $0x18] sm:$0xff]
    %v738 = vld [vmem:[#allocation2 + $0x20] sm:$0xff]
    %v739 = vld [vmem:[#allocation2 + $0x28] sm:$0xff]
    %v740 = vld [vmem:[#allocation2 + $0x30] sm:$0xff]
    %747 = vrot.lane.b32.xlu0 %v735, 109
    %v748 = vpop.permute.xlu0 %747
    %749 = vrot.lane.b32.xlu0 %v736, 109
    %v750 = vpop.permute.xlu0 %749
    %751 = vrot.lane.b32.xlu0 %v737, 109
    %v752 = vpop.permute.xlu0 %751
    %753 = vrot.lane.b32.xlu0 %v738, 109
    %v754 = vpop.permute.xlu0 %753
    %755 = vrot.lane.b32.xlu0 %v739, 109
    %v756 = vpop.permute.xlu0 %755
    %757 = vrot.lane.b32.xlu0 %v740, 109
    %v758 = vpop.permute.xlu0 %757
    %vm759 = vcmask 891904
    %v760 = vsel %vm759, %v748, %v750
    %v761 = vsel %vm759, %v750, %v752
    %v762 = vsel %vm759, %v752, %v754
    %v763 = vsel %vm759, %v754, %v756
    %v764 = vsel %vm759, %v756, %v758
    %771 = vst [vmem:[#allocation3 + $0x180] sm:$0xff] %v760
    %772 = vst [vmem:[#allocation3 + $0x188] sm:$0xff] %v761
    %773 = vst [vmem:[#allocation3 + $0x190] sm:$0xff] %v762
    %774 = vst [vmem:[#allocation3 + $0x198] sm:$0xff] %v763
    %775 = vst [vmem:[#allocation3 + $0x1a0] sm:$0xff] %v764
    %776 = vst.msk [vmem:[#allocation3 + $0x1a8] sm:$0xff] %vm76, %v758
    %v777 = vld [vmem:[%s3] sm:$0xff]
    %v778 = vld [vmem:[#allocation3] sm:$0xff]
    %v779 = vld [vmem:[#allocation3 + $0x8] sm:$0xff]
    %v780 = vld [vmem:[#allocation3 + $0x10] sm:$0xff]
    %v781 = vld [vmem:[#allocation3 + $0x18] sm:$0xff]
    %v782 = vld [vmem:[#allocation3 + $0x20] sm:$0xff]
    %v783 = vld [vmem:[#allocation3 + $0x28] sm:$0xff]
    %v784 = vld [vmem:[#allocation3 + $0x30] sm:$0xff]
    %v785 = vld [vmem:[#allocation3 + $0x38] sm:$0xff]
    %v786 = vld [vmem:[#allocation3 + $0x40] sm:$0xff]
    %v787 = vld [vmem:[#allocation3 + $0x48] sm:$0xff]
    %v788 = vld [vmem:[#allocation3 + $0x50] sm:$0xff]
    %v789 = vld [vmem:[#allocation3 + $0x58] sm:$0xff]
    %v790 = vld [vmem:[#allocation3 + $0x60] sm:$0xff]
    %v791 = vld [vmem:[#allocation3 + $0x68] sm:$0xff]
    %v792 = vld [vmem:[#allocation3 + $0x70] sm:$0xff]
    %v793 = vld [vmem:[#allocation3 + $0x78] sm:$0xff]
    %v794 = vld [vmem:[#allocation3 + $0x80] sm:$0xff]
    %v795 = vld [vmem:[#allocation3 + $0x88] sm:$0xff]
    %v796 = vld [vmem:[#allocation3 + $0x90] sm:$0xff]
    %v797 = vld [vmem:[#allocation3 + $0x98] sm:$0xff]
    %v798 = vld [vmem:[#allocation3 + $0xa0] sm:$0xff]
    %v799 = vld [vmem:[#allocation3 + $0xa8] sm:$0xff]
    %v800 = vld [vmem:[#allocation3 + $0xb0] sm:$0xff]
    %v801 = vld [vmem:[#allocation3 + $0xb8] sm:$0xff]
    %v802 = vld [vmem:[#allocation3 + $0xc0] sm:$0xff]
    %v803 = vld [vmem:[#allocation3 + $0xc8] sm:$0xff]
    %v804 = vld [vmem:[#allocation3 + $0xd0] sm:$0xff]
    %v805 = vld [vmem:[#allocation3 + $0xd8] sm:$0xff]
    %v806 = vld [vmem:[#allocation3 + $0xe0] sm:$0xff]
    %v807 = vld [vmem:[#allocation3 + $0xe8] sm:$0xff]
    %v808 = vld [vmem:[#allocation3 + $0xf0] sm:$0xff]
    %v809 = vld [vmem:[#allocation3 + $0xf8] sm:$0xff]
    %v810 = vld [vmem:[#allocation3 + $0x100] sm:$0xff]
    %v811 = vld [vmem:[#allocation3 + $0x108] sm:$0xff]
    %v812 = vld [vmem:[#allocation3 + $0x110] sm:$0xff]
    %v813 = vld [vmem:[#allocation3 + $0x118] sm:$0xff]
    %v814 = vld [vmem:[#allocation3 + $0x120] sm:$0xff]
    %v815 = vld [vmem:[#allocation3 + $0x128] sm:$0xff]
    %v816 = vld [vmem:[#allocation3 + $0x130] sm:$0xff]
    %v817 = vld [vmem:[#allocation3 + $0x138] sm:$0xff]
    %v818 = vld [vmem:[#allocation3 + $0x140] sm:$0xff]
    %v819 = vld [vmem:[#allocation3 + $0x148] sm:$0xff]
    %v820 = vld [vmem:[#allocation3 + $0x150] sm:$0xff]
    %v821 = vld [vmem:[#allocation3 + $0x158] sm:$0xff]
    %v822 = vld [vmem:[#allocation3 + $0x160] sm:$0xff]
    %v823 = vld [vmem:[#allocation3 + $0x168] sm:$0xff]
    %v824 = vld [vmem:[#allocation3 + $0x170] sm:$0xff]
    %v825 = vld [vmem:[#allocation3 + $0x178] sm:$0xff]
    %v826 = vld [vmem:[#allocation3 + $0x180] sm:$0xff]
    %v827 = vld [vmem:[#allocation3 + $0x188] sm:$0xff]
    %v828 = vld [vmem:[#allocation3 + $0x190] sm:$0xff]
    %v829 = vld [vmem:[#allocation3 + $0x198] sm:$0xff]
    %v830 = vld [vmem:[#allocation3 + $0x1a0] sm:$0xff]
    %v831 = vld [vmem:[#allocation3 + $0x1a8] sm:$0xff]
    %vm832 = vcmask 588800
    %v834 = vsel %vm832, %v777, 0
    %836 = vmatprep.subr.mxu0 %v779
    %837 = vmatpush1.msra.mxu0 %v778
    %838 = vmatprep.subr.mxu0 %v785
    %839 = vmatpush1.msra.mxu0 %v784
    %840 = vmatprep.subr.mxu0 %v791
    %841 = vmatpush1.msra.mxu0 %v790
    %842 = vmatprep.subr.mxu0 %v797
    %843 = vmatpush1.msra.mxu0 %v796
    %844 = vmatprep.subr.mxu0 %v803
    %845 = vmatpush1.msra.mxu0 %v802
    %846 = vmatprep.subr.mxu0 %v809
    %847 = vmatpush1.msra.mxu0 %v808
    %848 = vmatprep.subr.mxu0 %v815
    %849 = vmatpush1.msra.mxu0 %v814
    %850 = vmatprep.subr.mxu0 %v821
    %851 = vmatpush1.msra.mxu0 %v820
    %852 = vmatprep.subr.mxu0 %v827
    %853 = vmatpush1.msra.mxu0 %v826
    %854 = vmatprep.subr.mxu0 0.0
    %855 = vmatpush1.msra.mxu0 0.0
    %856 = vmatprep.subr.mxu0 0.0
    %857 = vmatpush1.msra.mxu0 0.0
    %858 = vmatprep.subr.mxu0 0.0
    %859 = vmatpush1.msra.mxu0 0.0
    %860 = vmatprep.subr.mxu0 0.0
    %861 = vmatpush1.msra.mxu0 0.0
    %862 = vmatprep.subr.mxu0 0.0
    %863 = vmatpush1.msra.mxu0 0.0
    %864 = vmatprep.subr.mxu0 0.0
    %865 = vmatpush1.msra.mxu0 0.0
    %866 = vmatprep.subr.mxu0 0.0
    %867 = vmatpush1.msra.mxu0 0.0
    %868 = vmatprep.subr.mxu0 0.0
    %869 = vmatpush1.msra.mxu0 0.0
    %870 = vmatprep.subr.mxu0 0.0
    %871 = vmatpush1.msra.mxu0 0.0
    %872 = vmatprep.subr.mxu0 0.0
    %873 = vmatpush1.msra.mxu0 0.0
    %874 = vmatprep.subr.mxu0 0.0
    %875 = vmatpush1.msra.mxu0 0.0
    %876 = vmatprep.subr.mxu0 0.0
    %877 = vmatpush1.msra.mxu0 0.0
    %878 = vmatprep.subr.mxu0 0.0
    %879 = vmatpush1.msra.mxu0 0.0
    %880 = vmatprep.subr.mxu0 0.0
    %881 = vmatpush1.msra.mxu0 0.0
    %882 = vmatprep.subr.mxu0 0.0
    %883 = vmatpush1.msra.mxu0 0.0
    %884 = vmatprep.subr.mxu0 0.0
    %885 = vmatpush1.msra.mxu0 0.0
    %886 = vmatprep.subr.mxu0 0.0
    %887 = vmatpush1.msra.mxu0 0.0
    %888 = vmatprep.subr.mxu0 0.0
    %889 = vmatpush1.msra.mxu0 0.0
    %890 = vmatprep.subr.mxu0 0.0
    %891 = vmatpush1.msra.mxu0 0.0
    %892 = vmatprep.subr.mxu0 0.0
    %893 = vmatpush1.msra.mxu0 0.0
    %894 = vmatprep.subr.mxu0 0.0
    %895 = vmatpush1.msra.mxu0 0.0
    %896 = vmatprep.subr.mxu0 0.0
    %897 = vmatpush1.msra.mxu0 0.0
    %898 = vmatprep.subr.mxu0 0.0
    %899 = vmatpush1.msra.mxu0 0.0
    %900 = vmatprep.mubr.f32.mxu0 0.0
    %901 = vmatmul.mubr.f32.gmra.mrb[0].mxu0 %v834
    %v902 = vpop.f32.mrb[0].mxu0
    %v903 = vadd.f32 0.0, %v902
    %v904 = vpop.f32.mrb[0].mxu0
    %v905 = vadd.f32 0.0, %v904
    %906 = vdwg.mxu0
    %907 = vmatprep.subr.mxu0 %v781
    %908 = vmatpush1.msra.mxu0 %v780
    %909 = vmatprep.subr.mxu0 %v787
    %910 = vmatpush1.msra.mxu0 %v786
    %911 = vmatprep.subr.mxu0 %v793
    %912 = vmatpush1.msra.mxu0 %v792
    %913 = vmatprep.subr.mxu0 %v799
    %914 = vmatpush1.msra.mxu0 %v798
    %915 = vmatprep.subr.mxu0 %v805
    %916 = vmatpush1.msra.mxu0 %v804
    %917 = vmatprep.subr.mxu0 %v811
    %918 = vmatpush1.msra.mxu0 %v810
    %919 = vmatprep.subr.mxu0 %v817
    %920 = vmatpush1.msra.mxu0 %v816
    %921 = vmatprep.subr.mxu0 %v823
    %922 = vmatpush1.msra.mxu0 %v822
    %923 = vmatprep.subr.mxu0 %v829
    %924 = vmatpush1.msra.mxu0 %v828
    %925 = vmatprep.subr.mxu0 0.0
    %926 = vmatpush1.msra.mxu0 0.0
    %927 = vmatprep.subr.mxu0 0.0
    %928 = vmatpush1.msra.mxu0 0.0
    %929 = vmatprep.subr.mxu0 0.0
    %930 = vmatpush1.msra.mxu0 0.0
    %931 = vmatprep.subr.mxu0 0.0
    %932 = vmatpush1.msra.mxu0 0.0
    %933 = vmatprep.subr.mxu0 0.0
    %934 = vmatpush1.msra.mxu0 0.0
    %935 = vmatprep.subr.mxu0 0.0
    %936 = vmatpush1.msra.mxu0 0.0
    %937 = vmatprep.subr.mxu0 0.0
    %938 = vmatpush1.msra.mxu0 0.0
    %939 = vmatprep.subr.mxu0 0.0
    %940 = vmatpush1.msra.mxu0 0.0
    %941 = vmatprep.subr.mxu0 0.0
    %942 = vmatpush1.msra.mxu0 0.0
    %943 = vmatprep.subr.mxu0 0.0
    %944 = vmatpush1.msra.mxu0 0.0
    %945 = vmatprep.subr.mxu0 0.0
    %946 = vmatpush1.msra.mxu0 0.0
    %947 = vmatprep.subr.mxu0 0.0
    %948 = vmatpush1.msra.mxu0 0.0
    %949 = vmatprep.subr.mxu0 0.0
    %950 = vmatpush1.msra.mxu0 0.0
    %951 = vmatprep.subr.mxu0 0.0
    %952 = vmatpush1.msra.mxu0 0.0
    %953 = vmatprep.subr.mxu0 0.0
    %954 = vmatpush1.msra.mxu0 0.0
    %955 = vmatprep.subr.mxu0 0.0
    %956 = vmatpush1.msra.mxu0 0.0
    %957 = vmatprep.subr.mxu0 0.0
    %958 = vmatpush1.msra.mxu0 0.0
    %959 = vmatprep.subr.mxu0 0.0
    %960 = vmatpush1.msra.mxu0 0.0
    %961 = vmatprep.subr.mxu0 0.0
    %962 = vmatpush1.msra.mxu0 0.0
    %963 = vmatprep.subr.mxu0 0.0
    %964 = vmatpush1.msra.mxu0 0.0
    %965 = vmatprep.subr.mxu0 0.0
    %966 = vmatpush1.msra.mxu0 0.0
    %967 = vmatprep.subr.mxu0 0.0
    %968 = vmatpush1.msra.mxu0 0.0
    %969 = vmatprep.subr.mxu0 0.0
    %970 = vmatpush1.msra.mxu0 0.0
    %971 = vmatprep.mubr.f32.mxu0 0.0
    %972 = vmatmul.mubr.f32.gmra.mrb[0].mxu0 %v834
    %v973 = vpop.f32.mrb[0].mxu0
    %v974 = vadd.f32 0.0, %v973
    %v975 = vpop.f32.mrb[0].mxu0
    %v976 = vadd.f32 0.0, %v975
    %977 = vdwg.mxu0
    %978 = vmatprep.subr.mxu0 %v783
    %979 = vmatpush1.msra.mxu0 %v782
    %980 = vmatprep.subr.mxu0 %v789
    %981 = vmatpush1.msra.mxu0 %v788
    %982 = vmatprep.subr.mxu0 %v795
    %983 = vmatpush1.msra.mxu0 %v794
    %984 = vmatprep.subr.mxu0 %v801
    %985 = vmatpush1.msra.mxu0 %v800
    %986 = vmatprep.subr.mxu0 %v807
    %987 = vmatpush1.msra.mxu0 %v806
    %988 = vmatprep.subr.mxu0 %v813
    %989 = vmatpush1.msra.mxu0 %v812
    %990 = vmatprep.subr.mxu0 %v819
    %991 = vmatpush1.msra.mxu0 %v818
    %992 = vmatprep.subr.mxu0 %v825
    %993 = vmatpush1.msra.mxu0 %v824
    %994 = vmatprep.subr.mxu0 %v831
    %995 = vmatpush1.msra.mxu0 %v830
    %996 = vmatprep.subr.mxu0 0.0
    %997 = vmatpush1.msra.mxu0 0.0
    %998 = vmatprep.subr.mxu0 0.0
    %999 = vmatpush1.msra.mxu0 0.0
    %1000 = vmatprep.subr.mxu0 0.0
    %1001 = vmatpush1.msra.mxu0 0.0
    %1002 = vmatprep.subr.mxu0 0.0
    %1003 = vmatpush1.msra.mxu0 0.0
    %1004 = vmatprep.subr.mxu0 0.0
    %1005 = vmatpush1.msra.mxu0 0.0
    %1006 = vmatprep.subr.mxu0 0.0
    %1007 = vmatpush1.msra.mxu0 0.0
    %1008 = vmatprep.subr.mxu0 0.0
    %1009 = vmatpush1.msra.mxu0 0.0
    %1010 = vmatprep.subr.mxu0 0.0
    %1011 = vmatpush1.msra.mxu0 0.0
    %1012 = vmatprep.subr.mxu0 0.0
    %1013 = vmatpush1.msra.mxu0 0.0
    %1014 = vmatprep.subr.mxu0 0.0
    %1015 = vmatpush1.msra.mxu0 0.0
    %1016 = vmatprep.subr.mxu0 0.0
    %1017 = vmatpush1.msra.mxu0 0.0
    %1018 = vmatprep.subr.mxu0 0.0
    %1019 = vmatpush1.msra.mxu0 0.0
    %1020 = vmatprep.subr.mxu0 0.0
    %1021 = vmatpush1.msra.mxu0 0.0
    %1022 = vmatprep.subr.mxu0 0.0
    %1023 = vmatpush1.msra.mxu0 0.0
    %1024 = vmatprep.subr.mxu0 0.0
    %1025 = vmatpush1.msra.mxu0 0.0
    %1026 = vmatprep.subr.mxu0 0.0
    %1027 = vmatpush1.msra.mxu0 0.0
    %1028 = vmatprep.subr.mxu0 0.0
    %1029 = vmatpush1.msra.mxu0 0.0
    %1030 = vmatprep.subr.mxu0 0.0
    %1031 = vmatpush1.msra.mxu0 0.0
    %1032 = vmatprep.subr.mxu0 0.0
    %1033 = vmatpush1.msra.mxu0 0.0
    %1034 = vmatprep.subr.mxu0 0.0
    %1035 = vmatpush1.msra.mxu0 0.0
    %1036 = vmatprep.subr.mxu0 0.0
    %1037 = vmatpush1.msra.mxu0 0.0
    %1038 = vmatprep.subr.mxu0 0.0
    %1039 = vmatpush1.msra.mxu0 0.0
    %1040 = vmatprep.subr.mxu0 0.0
    %1041 = vmatpush1.msra.mxu0 0.0
    %1042 = vmatprep.mubr.f32.mxu0 0.0
    %1043 = vmatmul.mubr.f32.gmra.mrb[0].mxu0 %v834
    %v1044 = vpop.f32.mrb[0].mxu0
    %v1045 = vadd.f32 0.0, %v1044
    %v1046 = vpop.f32.mrb[0].mxu0
    %v1047 = vadd.f32 0.0, %v1046
    %1048 = vdwg.mxu0
    %v1049 = vld [vmem:[#allocation10] sm:$0xff]
    %v1050 = vmul.f32 %v903, %v298
    %v1051 = vmul.f32 %v905, %v302
    %v1052 = vmul.f32 %v974, %v306
    %v1053 = vmul.f32 %v976, %v310
    %v1054 = vmul.f32 %v1045, %v314
    %v1055 = vmul.f32 %v1047, %v318
    %v1056 = vadd.f32 %v1050, %v1051
    %v1057 = vadd.f32 %v1056, %v1052
    %v1058 = vadd.f32 %v1057, %v1053
    %v1059 = vadd.f32 %v1058, %v1054
    %v1060 = vsel %vm76, %v1055, 0.0
    %v1061 = vadd.f32 %v1059, %v1060
    %1062 = vadd.xlane.f32.xlu0 %v1061
    %v1063 = vpop.xlane.xlu0 %1062
    %v1064 = vmul.f32 %v1063, 0.001953125
    %v1065 = vsub.f32 %v903, %v1064
    %v1066 = vsub.f32 %v905, %v1064
    %v1067 = vsub.f32 %v974, %v1064
    %v1068 = vsub.f32 %v976, %v1064
    %v1069 = vsub.f32 %v1045, %v1064
    %v1070 = vsub.f32 %v1047, %v1064
    %v1071 = vmul.f32 %v1065, %v298
    %v1072 = vmul.f32 %v1066, %v302
    %v1073 = vmul.f32 %v1067, %v306
    %v1074 = vmul.f32 %v1068, %v310
    %v1075 = vmul.f32 %v1069, %v314
    %v1076 = vmul.f32 %v1070, %v318
    %v1077 = vmul.f32 %v1071, %v1071
    %v1078 = vmul.f32 %v1072, %v1072
    %v1079 = vmul.f32 %v1073, %v1073
    %v1080 = vmul.f32 %v1074, %v1074
    %v1081 = vmul.f32 %v1075, %v1075
    %v1082 = vmul.f32 %v1076, %v1076
    %v1083 = vadd.f32 %v1077, %v1078
    %v1084 = vadd.f32 %v1083, %v1079
    %v1085 = vadd.f32 %v1084, %v1080
    %v1086 = vadd.f32 %v1085, %v1081
    %v1087 = vsel %vm76, %v1082, 0.0
    %v1088 = vadd.f32 %v1086, %v1087
    %1089 = vadd.xlane.f32.xlu0 %v1088
    %v1090 = vpop.xlane.xlu0 %1089
    %v1091 = vmul.f32 %v1090, 0.001953125
    %v1092 = vadd.f32 %v1091, 1e-05
    %v1093 = vrsqrt.pop %v1092
    %v1094 = vmul.f32 %v1049, %v1093
    %v1095 = vmul.f32 %v1064, %v1094
    %1097 = vrot.lane.b32.xlu0 %v1095, 1
    %v1098 = vpop.permute.xlu0 %1097
    %v1100 = vsub.f32 %v1049, %v1098
    %1102 = vset.pattern.permute.xlu0 2
    %1103 = vperm.xlu0 %1102, %v1094
    %v1104 = vpop.permute.xlu0 %1103
    %v1106 = vmul.f32 %v903, %v1104
    %v1107 = vmul.f32 %v905, %v1104
    %v1108 = vmul.f32 %v974, %v1104
    %v1109 = vmul.f32 %v976, %v1104
    %v1110 = vmul.f32 %v1045, %v1104
    %v1111 = vmul.f32 %v1047, %v1104
    %1113 = vset.pattern.permute.xlu0 3
    %1114 = vperm.xlu0 %1113, %v1100
    %v1115 = vpop.permute.xlu0 %1114
    %v1117 = vadd.f32 %v1106, %v1115
    %v1118 = vadd.f32 %v1107, %v1115
    %v1119 = vadd.f32 %v1108, %v1115
    %v1120 = vadd.f32 %v1109, %v1115
    %v1121 = vadd.f32 %v1110, %v1115
    %v1122 = vadd.f32 %v1111, %v1115
    %v1123 = vmax.f32 %v1117, 0.0
    %v1124 = vmax.f32 %v1118, 0.0
    %v1125 = vmax.f32 %v1119, 0.0
    %v1126 = vmax.f32 %v1120, 0.0
    %v1127 = vmax.f32 %v1121, 0.0
    %v1128 = vmax.f32 %v1122, 0.0
    %v1129 = vld [vmem:[#allocation9] sm:$0xff]
    %1131 = vrot.lane.b32.xlu0 %v1129, 120
    %v1132 = vpop.permute.xlu0 %1131
    %v1133 = vsel %vm76, %v1132, 0
    %1135 = vmatprep.subr.mxu0 %v1124
    %1136 = vmatpush1.msra.mxu0 %v1123
    %1137 = vmatprep.subr.mxu0 0.0
    %1138 = vmatpush1.msra.mxu0 0.0
    %1139 = vmatprep.subr.mxu0 0.0
    %1140 = vmatpush1.msra.mxu0 0.0
    %1141 = vmatprep.subr.mxu0 0.0
    %1142 = vmatpush1.msra.mxu0 0.0
    %1143 = vmatprep.subr.mxu0 0.0
    %1144 = vmatpush1.msra.mxu0 0.0
    %1145 = vmatprep.subr.mxu0 0.0
    %1146 = vmatpush1.msra.mxu0 0.0
    %1147 = vmatprep.subr.mxu0 0.0
    %1148 = vmatpush1.msra.mxu0 0.0
    %1149 = vmatprep.subr.mxu0 0.0
    %1150 = vmatpush1.msra.mxu0 0.0
    %1151 = vmatprep.subr.mxu0 0.0
    %1152 = vmatpush1.msra.mxu0 0.0
    %1153 = vmatprep.subr.mxu0 0.0
    %1154 = vmatpush1.msra.mxu0 0.0
    %1155 = vmatprep.subr.mxu0 0.0
    %1156 = vmatpush1.msra.mxu0 0.0
    %1157 = vmatprep.subr.mxu0 0.0
    %1158 = vmatpush1.msra.mxu0 0.0
    %1159 = vmatprep.subr.mxu0 0.0
    %1160 = vmatpush1.msra.mxu0 0.0
    %1161 = vmatprep.subr.mxu0 0.0
    %1162 = vmatpush1.msra.mxu0 0.0
    %1163 = vmatprep.subr.mxu0 0.0
    %1164 = vmatpush1.msra.mxu0 0.0
    %1165 = vmatprep.subr.mxu0 0.0
    %1166 = vmatpush1.msra.mxu0 0.0
    %1167 = vmatprep.subr.mxu0 0.0
    %1168 = vmatpush1.msra.mxu0 0.0
    %1169 = vmatprep.subr.mxu0 0.0
    %1170 = vmatpush1.msra.mxu0 0.0
    %1171 = vmatprep.subr.mxu0 0.0
    %1172 = vmatpush1.msra.mxu0 0.0
    %1173 = vmatprep.subr.mxu0 0.0
    %1174 = vmatpush1.msra.mxu0 0.0
    %1175 = vmatprep.subr.mxu0 0.0
    %1176 = vmatpush1.msra.mxu0 0.0
    %1177 = vmatprep.subr.mxu0 0.0
    %1178 = vmatpush1.msra.mxu0 0.0
    %1179 = vmatprep.subr.mxu0 0.0
    %1180 = vmatpush1.msra.mxu0 0.0
    %1181 = vmatprep.subr.mxu0 0.0
    %1182 = vmatpush1.msra.mxu0 0.0
    %1183 = vmatprep.subr.mxu0 0.0
    %1184 = vmatpush1.msra.mxu0 0.0
    %1185 = vmatprep.subr.mxu0 0.0
    %1186 = vmatpush1.msra.mxu0 0.0
    %1187 = vmatprep.subr.mxu0 0.0
    %1188 = vmatpush1.msra.mxu0 0.0
    %1189 = vmatprep.subr.mxu0 0.0
    %1190 = vmatpush1.msra.mxu0 0.0
    %1191 = vmatprep.subr.mxu0 0.0
    %1192 = vmatpush1.msra.mxu0 0.0
    %1193 = vmatprep.subr.mxu0 0.0
    %1194 = vmatpush1.msra.mxu0 0.0
    %1195 = vmatprep.subr.mxu0 0.0
    %1196 = vmatpush1.msra.mxu0 0.0
    %1197 = vmatprep.subr.mxu0 0.0
    %1198 = vmatpush1.msra.mxu0 0.0
    %1199 = vmatprep.mubr.f32.mxu0 0.0
    %1200 = vmatmul.mubr.f32.gmra.mrb[0].mxu0 %v1133
    %v1201 = vpop.f32.mrb[0].mxu0
    %v1202 = vadd.f32 0.0, %v1201
    %v1203 = vpop.f32.mrb[0].mxu0
    %v1204 = vadd.f32 0.0, %v1203
    %1205 = vdwg.mxu0
    %1206 = vmatprep.subr.mxu0 %v1126
    %1207 = vmatpush1.msra.mxu0 %v1125
    %1208 = vmatprep.subr.mxu0 0.0
    %1209 = vmatpush1.msra.mxu0 0.0
    %1210 = vmatprep.subr.mxu0 0.0
    %1211 = vmatpush1.msra.mxu0 0.0
    %1212 = vmatprep.subr.mxu0 0.0
    %1213 = vmatpush1.msra.mxu0 0.0
    %1214 = vmatprep.subr.mxu0 0.0
    %1215 = vmatpush1.msra.mxu0 0.0
    %1216 = vmatprep.subr.mxu0 0.0
    %1217 = vmatpush1.msra.mxu0 0.0
    %1218 = vmatprep.subr.mxu0 0.0
    %1219 = vmatpush1.msra.mxu0 0.0
    %1220 = vmatprep.subr.mxu0 0.0
    %1221 = vmatpush1.msra.mxu0 0.0
    %1222 = vmatprep.subr.mxu0 0.0
    %1223 = vmatpush1.msra.mxu0 0.0
    %1224 = vmatprep.subr.mxu0 0.0
    %1225 = vmatpush1.msra.mxu0 0.0
    %1226 = vmatprep.subr.mxu0 0.0
    %1227 = vmatpush1.msra.mxu0 0.0
    %1228 = vmatprep.subr.mxu0 0.0
    %1229 = vmatpush1.msra.mxu0 0.0
    %1230 = vmatprep.subr.mxu0 0.0
    %1231 = vmatpush1.msra.mxu0 0.0
    %1232 = vmatprep.subr.mxu0 0.0
    %1233 = vmatpush1.msra.mxu0 0.0
    %1234 = vmatprep.subr.mxu0 0.0
    %1235 = vmatpush1.msra.mxu0 0.0
    %1236 = vmatprep.subr.mxu0 0.0
    %1237 = vmatpush1.msra.mxu0 0.0
    %1238 = vmatprep.subr.mxu0 0.0
    %1239 = vmatpush1.msra.mxu0 0.0
    %1240 = vmatprep.subr.mxu0 0.0
    %1241 = vmatpush1.msra.mxu0 0.0
    %1242 = vmatprep.subr.mxu0 0.0
    %1243 = vmatpush1.msra.mxu0 0.0
    %1244 = vmatprep.subr.mxu0 0.0
    %1245 = vmatpush1.msra.mxu0 0.0
    %1246 = vmatprep.subr.mxu0 0.0
    %1247 = vmatpush1.msra.mxu0 0.0
    %1248 = vmatprep.subr.mxu0 0.0
    %1249 = vmatpush1.msra.mxu0 0.0
    %1250 = vmatprep.subr.mxu0 0.0
    %1251 = vmatpush1.msra.mxu0 0.0
    %1252 = vmatprep.subr.mxu0 0.0
    %1253 = vmatpush1.msra.mxu0 0.0
    %1254 = vmatprep.subr.mxu0 0.0
    %1255 = vmatpush1.msra.mxu0 0.0
    %1256 = vmatprep.subr.mxu0 0.0
    %1257 = vmatpush1.msra.mxu0 0.0
    %1258 = vmatprep.subr.mxu0 0.0
    %1259 = vmatpush1.msra.mxu0 0.0
    %1260 = vmatprep.subr.mxu0 0.0
    %1261 = vmatpush1.msra.mxu0 0.0
    %1262 = vmatprep.subr.mxu0 0.0
    %1263 = vmatpush1.msra.mxu0 0.0
    %1264 = vmatprep.subr.mxu0 0.0
    %1265 = vmatpush1.msra.mxu0 0.0
    %1266 = vmatprep.subr.mxu0 0.0
    %1267 = vmatpush1.msra.mxu0 0.0
    %1268 = vmatprep.subr.mxu0 0.0
    %1269 = vmatpush1.msra.mxu0 0.0
    %1270 = vmatprep.mubr.f32.mxu0 0.0
    %1271 = vmatmul.mubr.f32.gmra.mrb[0].mxu0 %v1133
    %v1272 = vpop.f32.mrb[0].mxu0
    %v1273 = vadd.f32 0.0, %v1272
    %v1274 = vpop.f32.mrb[0].mxu0
    %v1275 = vadd.f32 0.0, %v1274
    %1276 = vdwg.mxu0
    %1277 = vmatprep.subr.mxu0 %v1128
    %1278 = vmatpush1.msra.mxu0 %v1127
    %1279 = vmatprep.subr.mxu0 0.0
    %1280 = vmatpush1.msra.mxu0 0.0
    %1281 = vmatprep.subr.mxu0 0.0
    %1282 = vmatpush1.msra.mxu0 0.0
    %1283 = vmatprep.subr.mxu0 0.0
    %1284 = vmatpush1.msra.mxu0 0.0
    %1285 = vmatprep.subr.mxu0 0.0
    %1286 = vmatpush1.msra.mxu0 0.0
    %1287 = vmatprep.subr.mxu0 0.0
    %1288 = vmatpush1.msra.mxu0 0.0
    %1289 = vmatprep.subr.mxu0 0.0
    %1290 = vmatpush1.msra.mxu0 0.0
    %1291 = vmatprep.subr.mxu0 0.0
    %1292 = vmatpush1.msra.mxu0 0.0
    %1293 = vmatprep.subr.mxu0 0.0
    %1294 = vmatpush1.msra.mxu0 0.0
    %1295 = vmatprep.subr.mxu0 0.0
    %1296 = vmatpush1.msra.mxu0 0.0
    %1297 = vmatprep.subr.mxu0 0.0
    %1298 = vmatpush1.msra.mxu0 0.0
    %1299 = vmatprep.subr.mxu0 0.0
    %1300 = vmatpush1.msra.mxu0 0.0
    %1301 = vmatprep.subr.mxu0 0.0
    %1302 = vmatpush1.msra.mxu0 0.0
    %1303 = vmatprep.subr.mxu0 0.0
    %1304 = vmatpush1.msra.mxu0 0.0
    %1305 = vmatprep.subr.mxu0 0.0
    %1306 = vmatpush1.msra.mxu0 0.0
    %1307 = vmatprep.subr.mxu0 0.0
    %1308 = vmatpush1.msra.mxu0 0.0
    %1309 = vmatprep.subr.mxu0 0.0
    %1310 = vmatpush1.msra.mxu0 0.0
    %1311 = vmatprep.subr.mxu0 0.0
    %1312 = vmatpush1.msra.mxu0 0.0
    %1313 = vmatprep.subr.mxu0 0.0
    %1314 = vmatpush1.msra.mxu0 0.0
    %1315 = vmatprep.subr.mxu0 0.0
    %1316 = vmatpush1.msra.mxu0 0.0
    %1317 = vmatprep.subr.mxu0 0.0
    %1318 = vmatpush1.msra.mxu0 0.0
    %1319 = vmatprep.subr.mxu0 0.0
    %1320 = vmatpush1.msra.mxu0 0.0
    %1321 = vmatprep.subr.mxu0 0.0
    %1322 = vmatpush1.msra.mxu0 0.0
    %1323 = vmatprep.subr.mxu0 0.0
    %1324 = vmatpush1.msra.mxu0 0.0
    %1325 = vmatprep.subr.mxu0 0.0
    %1326 = vmatpush1.msra.mxu0 0.0
    %1327 = vmatprep.subr.mxu0 0.0
    %1328 = vmatpush1.msra.mxu0 0.0
    %1329 = vmatprep.subr.mxu0 0.0
    %1330 = vmatpush1.msra.mxu0 0.0
    %1331 = vmatprep.subr.mxu0 0.0
    %1332 = vmatpush1.msra.mxu0 0.0
    %1333 = vmatprep.subr.mxu0 0.0
    %1334 = vmatpush1.msra.mxu0 0.0
    %1335 = vmatprep.subr.mxu0 0.0
    %1336 = vmatpush1.msra.mxu0 0.0
    %1337 = vmatprep.subr.mxu0 0.0
    %1338 = vmatpush1.msra.mxu0 0.0
    %1339 = vmatprep.subr.mxu0 0.0
    %1340 = vmatpush1.msra.mxu0 0.0
    %1341 = vmatprep.mubr.f32.mxu0 0.0
    %1342 = vmatmul.mubr.f32.gmra.mrb[0].mxu0 %v1133
    %v1343 = vpop.f32.mrb[0].mxu0
    %v1344 = vadd.f32 0.0, %v1343
    %v1345 = vpop.f32.mrb[0].mxu0
    %v1346 = vadd.f32 0.0, %v1345
    %1347 = vdwg.mxu0
    %v1348 = vmul.f32 %v1202, %v298
    %v1349 = vmul.f32 %v1204, %v302
    %v1350 = vmul.f32 %v1273, %v306
    %v1351 = vmul.f32 %v1275, %v310
    %v1352 = vmul.f32 %v1344, %v314
    %v1353 = vmul.f32 %v1346, %v318
    %v1354 = vadd.f32 %v1348, %v1349
    %v1355 = vadd.f32 %v1354, %v1350
    %v1356 = vadd.f32 %v1355, %v1351
    %v1357 = vadd.f32 %v1356, %v1352
    %v1358 = vsel %vm76, %v1353, 0.0
    %v1359 = vadd.f32 %v1357, %v1358
    %1360 = vadd.xlane.f32.xlu0 %v1359
    %v1361 = vpop.xlane.xlu0 %1360
    %v1362 = vmul.f32 %v1361, 0.001953125
    %v1363 = vsub.f32 %v1202, %v1362
    %v1364 = vsub.f32 %v1204, %v1362
    %v1365 = vsub.f32 %v1273, %v1362
    %v1366 = vsub.f32 %v1275, %v1362
    %v1367 = vsub.f32 %v1344, %v1362
    %v1368 = vsub.f32 %v1346, %v1362
    %v1369 = vmul.f32 %v1363, %v298
    %v1370 = vmul.f32 %v1364, %v302
    %v1371 = vmul.f32 %v1365, %v306
    %v1372 = vmul.f32 %v1366, %v310
    %v1373 = vmul.f32 %v1367, %v314
    %v1374 = vmul.f32 %v1368, %v318
    %v1375 = vmul.f32 %v1369, %v1369
    %v1376 = vmul.f32 %v1370, %v1370
    %v1377 = vmul.f32 %v1371, %v1371
    %v1378 = vmul.f32 %v1372, %v1372
    %v1379 = vmul.f32 %v1373, %v1373
    %v1380 = vmul.f32 %v1374, %v1374
    %v1381 = vadd.f32 %v1375, %v1376
    %v1382 = vadd.f32 %v1381, %v1377
    %v1383 = vadd.f32 %v1382, %v1378
    %v1384 = vadd.f32 %v1383, %v1379
    %v1385 = vsel %vm76, %v1380, 0.0
    %v1386 = vadd.f32 %v1384, %v1385
    %1387 = vadd.xlane.f32.xlu0 %v1386
    %v1388 = vpop.xlane.xlu0 %1387
    %v1389 = vmul.f32 %v1388, 0.001953125
    %v1390 = vadd.f32 %v1389, 1e-05
    %v1391 = vrsqrt.pop %v1390
    %v1392 = vmul.f32 %v1049, %v1391
    %v1393 = vmul.f32 %v1362, %v1392
    %1395 = vrot.lane.b32.xlu0 %v1393, 1
    %v1396 = vpop.permute.xlu0 %1395
    %v1398 = vsub.f32 %v1049, %v1396
    %1400 = vset.pattern.permute.xlu0 4
    %1401 = vperm.xlu0 %1400, %v1392
    %v1402 = vpop.permute.xlu0 %1401
    %v1404 = vmul.f32 %v1202, %v1402
    %v1405 = vmul.f32 %v1204, %v1402
    %v1406 = vmul.f32 %v1273, %v1402
    %v1407 = vmul.f32 %v1275, %v1402
    %v1408 = vmul.f32 %v1344, %v1402
    %v1409 = vmul.f32 %v1346, %v1402
    %1411 = vset.pattern.permute.xlu0 5
    %1412 = vperm.xlu0 %1411, %v1398
    %v1413 = vpop.permute.xlu0 %1412
    %v1415 = vadd.f32 %v1404, %v1413
    %v1416 = vadd.f32 %v1405, %v1413
    %v1417 = vadd.f32 %v1406, %v1413
    %v1418 = vadd.f32 %v1407, %v1413
    %v1419 = vadd.f32 %v1408, %v1413
    %v1420 = vadd.f32 %v1409, %v1413
    %1421 = vrot.lane.b32.xlu0 %v1129, 112
    %v1422 = vpop.permute.xlu0 %1421
    %v1423 = vsel %vm76, %v1422, 0
    %1425 = vmatprep.subr.mxu0 %v69
    %1426 = vmatpush1.msra.mxu0 %v68
    %1427 = vmatprep.subr.mxu0 0.0
    %1428 = vmatpush1.msra.mxu0 0.0
    %1429 = vmatprep.subr.mxu0 0.0
    %1430 = vmatpush1.msra.mxu0 0.0
    %1431 = vmatprep.subr.mxu0 0.0
    %1432 = vmatpush1.msra.mxu0 0.0
    %1433 = vmatprep.subr.mxu0 0.0
    %1434 = vmatpush1.msra.mxu0 0.0
    %1435 = vmatprep.subr.mxu0 0.0
    %1436 = vmatpush1.msra.mxu0 0.0
    %1437 = vmatprep.subr.mxu0 0.0
    %1438 = vmatpush1.msra.mxu0 0.0
    %1439 = vmatprep.subr.mxu0 0.0
    %1440 = vmatpush1.msra.mxu0 0.0
    %1441 = vmatprep.subr.mxu0 0.0
    %1442 = vmatpush1.msra.mxu0 0.0
    %1443 = vmatprep.subr.mxu0 0.0
    %1444 = vmatpush1.msra.mxu0 0.0
    %1445 = vmatprep.subr.mxu0 0.0
    %1446 = vmatpush1.msra.mxu0 0.0
    %1447 = vmatprep.subr.mxu0 0.0
    %1448 = vmatpush1.msra.mxu0 0.0
    %1449 = vmatprep.subr.mxu0 0.0
    %1450 = vmatpush1.msra.mxu0 0.0
    %1451 = vmatprep.subr.mxu0 0.0
    %1452 = vmatpush1.msra.mxu0 0.0
    %1453 = vmatprep.subr.mxu0 0.0
    %1454 = vmatpush1.msra.mxu0 0.0
    %1455 = vmatprep.subr.mxu0 0.0
    %1456 = vmatpush1.msra.mxu0 0.0
    %1457 = vmatprep.subr.mxu0 0.0
    %1458 = vmatpush1.msra.mxu0 0.0
    %1459 = vmatprep.subr.mxu0 0.0
    %1460 = vmatpush1.msra.mxu0 0.0
    %1461 = vmatprep.subr.mxu0 0.0
    %1462 = vmatpush1.msra.mxu0 0.0
    %1463 = vmatprep.subr.mxu0 0.0
    %1464 = vmatpush1.msra.mxu0 0.0
    %1465 = vmatprep.subr.mxu0 0.0
    %1466 = vmatpush1.msra.mxu0 0.0
    %1467 = vmatprep.subr.mxu0 0.0
    %1468 = vmatpush1.msra.mxu0 0.0
    %1469 = vmatprep.subr.mxu0 0.0
    %1470 = vmatpush1.msra.mxu0 0.0
    %1471 = vmatprep.subr.mxu0 0.0
    %1472 = vmatpush1.msra.mxu0 0.0
    %1473 = vmatprep.subr.mxu0 0.0
    %1474 = vmatpush1.msra.mxu0 0.0
    %1475 = vmatprep.subr.mxu0 0.0
    %1476 = vmatpush1.msra.mxu0 0.0
    %1477 = vmatprep.subr.mxu0 0.0
    %1478 = vmatpush1.msra.mxu0 0.0
    %1479 = vmatprep.subr.mxu0 0.0
    %1480 = vmatpush1.msra.mxu0 0.0
    %1481 = vmatprep.subr.mxu0 0.0
    %1482 = vmatpush1.msra.mxu0 0.0
    %1483 = vmatprep.subr.mxu0 0.0
    %1484 = vmatpush1.msra.mxu0 0.0
    %1485 = vmatprep.subr.mxu0 0.0
    %1486 = vmatpush1.msra.mxu0 0.0
    %1487 = vmatprep.subr.mxu0 0.0
    %1488 = vmatpush1.msra.mxu0 0.0
    %1489 = vmatprep.mubr.f32.mxu0 0.0
    %1490 = vmatmul.mubr.f32.gmra.mrb[0].mxu0 %v1423
    %v1491 = vpop.f32.mrb[0].mxu0
    %v1492 = vadd.f32 0.0, %v1491
    %v1493 = vpop.f32.mrb[0].mxu0
    %v1494 = vadd.f32 0.0, %v1493
    %1495 = vdwg.mxu0
    %1496 = vmatprep.subr.mxu0 %v71
    %1497 = vmatpush1.msra.mxu0 %v70
    %1498 = vmatprep.subr.mxu0 0.0
    %1499 = vmatpush1.msra.mxu0 0.0
    %1500 = vmatprep.subr.mxu0 0.0
    %1501 = vmatpush1.msra.mxu0 0.0
    %1502 = vmatprep.subr.mxu0 0.0
    %1503 = vmatpush1.msra.mxu0 0.0
    %1504 = vmatprep.subr.mxu0 0.0
    %1505 = vmatpush1.msra.mxu0 0.0
    %1506 = vmatprep.subr.mxu0 0.0
    %1507 = vmatpush1.msra.mxu0 0.0
    %1508 = vmatprep.subr.mxu0 0.0
    %1509 = vmatpush1.msra.mxu0 0.0
    %1510 = vmatprep.subr.mxu0 0.0
    %1511 = vmatpush1.msra.mxu0 0.0
    %1512 = vmatprep.subr.mxu0 0.0
    %1513 = vmatpush1.msra.mxu0 0.0
    %1514 = vmatprep.subr.mxu0 0.0
    %1515 = vmatpush1.msra.mxu0 0.0
    %1516 = vmatprep.subr.mxu0 0.0
    %1517 = vmatpush1.msra.mxu0 0.0
    %1518 = vmatprep.subr.mxu0 0.0
    %1519 = vmatpush1.msra.mxu0 0.0
    %1520 = vmatprep.subr.mxu0 0.0
    %1521 = vmatpush1.msra.mxu0 0.0
    %1522 = vmatprep.subr.mxu0 0.0
    %1523 = vmatpush1.msra.mxu0 0.0
    %1524 = vmatprep.subr.mxu0 0.0
    %1525 = vmatpush1.msra.mxu0 0.0
    %1526 = vmatprep.subr.mxu0 0.0
    %1527 = vmatpush1.msra.mxu0 0.0
    %1528 = vmatprep.subr.mxu0 0.0
    %1529 = vmatpush1.msra.mxu0 0.0
    %1530 = vmatprep.subr.mxu0 0.0
    %1531 = vmatpush1.msra.mxu0 0.0
    %1532 = vmatprep.subr.mxu0 0.0
    %1533 = vmatpush1.msra.mxu0 0.0
    %1534 = vmatprep.subr.mxu0 0.0
    %1535 = vmatpush1.msra.mxu0 0.0
    %1536 = vmatprep.subr.mxu0 0.0
    %1537 = vmatpush1.msra.mxu0 0.0
    %1538 = vmatprep.subr.mxu0 0.0
    %1539 = vmatpush1.msra.mxu0 0.0
    %1540 = vmatprep.subr.mxu0 0.0
    %1541 = vmatpush1.msra.mxu0 0.0
    %1542 = vmatprep.subr.mxu0 0.0
    %1543 = vmatpush1.msra.mxu0 0.0
    %1544 = vmatprep.subr.mxu0 0.0
    %1545 = vmatpush1.msra.mxu0 0.0
    %1546 = vmatprep.subr.mxu0 0.0
    %1547 = vmatpush1.msra.mxu0 0.0
    %1548 = vmatprep.subr.mxu0 0.0
    %1549 = vmatpush1.msra.mxu0 0.0
    %1550 = vmatprep.subr.mxu0 0.0
    %1551 = vmatpush1.msra.mxu0 0.0
    %1552 = vmatprep.subr.mxu0 0.0
    %1553 = vmatpush1.msra.mxu0 0.0
    %1554 = vmatprep.subr.mxu0 0.0
    %1555 = vmatpush1.msra.mxu0 0.0
    %1556 = vmatprep.subr.mxu0 0.0
    %1557 = vmatpush1.msra.mxu0 0.0
    %1558 = vmatprep.subr.mxu0 0.0
    %1559 = vmatpush1.msra.mxu0 0.0
    %1560 = vmatprep.mubr.f32.mxu0 0.0
    %1561 = vmatmul.mubr.f32.gmra.mrb[0].mxu0 %v1423
    %v1562 = vpop.f32.mrb[0].mxu0
    %v1563 = vadd.f32 0.0, %v1562
    %v1564 = vpop.f32.mrb[0].mxu0
    %v1565 = vadd.f32 0.0, %v1564
    %1566 = vdwg.mxu0
    %1567 = vmatprep.subr.mxu0 %v73
    %1568 = vmatpush1.msra.mxu0 %v72
    %1569 = vmatprep.subr.mxu0 0.0
    %1570 = vmatpush1.msra.mxu0 0.0
    %1571 = vmatprep.subr.mxu0 0.0
    %1572 = vmatpush1.msra.mxu0 0.0
    %1573 = vmatprep.subr.mxu0 0.0
    %1574 = vmatpush1.msra.mxu0 0.0
    %1575 = vmatprep.subr.mxu0 0.0
    %1576 = vmatpush1.msra.mxu0 0.0
    %1577 = vmatprep.subr.mxu0 0.0
    %1578 = vmatpush1.msra.mxu0 0.0
    %1579 = vmatprep.subr.mxu0 0.0
    %1580 = vmatpush1.msra.mxu0 0.0
    %1581 = vmatprep.subr.mxu0 0.0
    %1582 = vmatpush1.msra.mxu0 0.0
    %1583 = vmatprep.subr.mxu0 0.0
    %1584 = vmatpush1.msra.mxu0 0.0
    %1585 = vmatprep.subr.mxu0 0.0
    %1586 = vmatpush1.msra.mxu0 0.0
    %1587 = vmatprep.subr.mxu0 0.0
    %1588 = vmatpush1.msra.mxu0 0.0
    %1589 = vmatprep.subr.mxu0 0.0
    %1590 = vmatpush1.msra.mxu0 0.0
    %1591 = vmatprep.subr.mxu0 0.0
    %1592 = vmatpush1.msra.mxu0 0.0
    %1593 = vmatprep.subr.mxu0 0.0
    %1594 = vmatpush1.msra.mxu0 0.0
    %1595 = vmatprep.subr.mxu0 0.0
    %1596 = vmatpush1.msra.mxu0 0.0
    %1597 = vmatprep.subr.mxu0 0.0
    %1598 = vmatpush1.msra.mxu0 0.0
    %1599 = vmatprep.subr.mxu0 0.0
    %1600 = vmatpush1.msra.mxu0 0.0
    %1601 = vmatprep.subr.mxu0 0.0
    %1602 = vmatpush1.msra.mxu0 0.0
    %1603 = vmatprep.subr.mxu0 0.0
    %1604 = vmatpush1.msra.mxu0 0.0
    %1605 = vmatprep.subr.mxu0 0.0
    %1606 = vmatpush1.msra.mxu0 0.0
    %1607 = vmatprep.subr.mxu0 0.0
    %1608 = vmatpush1.msra.mxu0 0.0
    %1609 = vmatprep.subr.mxu0 0.0
    %1610 = vmatpush1.msra.mxu0 0.0
    %1611 = vmatprep.subr.mxu0 0.0
    %1612 = vmatpush1.msra.mxu0 0.0
    %1613 = vmatprep.subr.mxu0 0.0
    %1614 = vmatpush1.msra.mxu0 0.0
    %1615 = vmatprep.subr.mxu0 0.0
    %1616 = vmatpush1.msra.mxu0 0.0
    %1617 = vmatprep.subr.mxu0 0.0
    %1618 = vmatpush1.msra.mxu0 0.0
    %1619 = vmatprep.subr.mxu0 0.0
    %1620 = vmatpush1.msra.mxu0 0.0
    %1621 = vmatprep.subr.mxu0 0.0
    %1622 = vmatpush1.msra.mxu0 0.0
    %1623 = vmatprep.subr.mxu0 0.0
    %1624 = vmatpush1.msra.mxu0 0.0
    %1625 = vmatprep.subr.mxu0 0.0
    %1626 = vmatpush1.msra.mxu0 0.0
    %1627 = vmatprep.subr.mxu0 0.0
    %1628 = vmatpush1.msra.mxu0 0.0
    %1629 = vmatprep.subr.mxu0 0.0
    %1630 = vmatpush1.msra.mxu0 0.0
    %1631 = vmatprep.mubr.f32.mxu0 0.0
    %1632 = vmatmul.mubr.f32.gmra.mrb[0].mxu0 %v1423
    %v1633 = vpop.f32.mrb[0].mxu0
    %v1634 = vadd.f32 0.0, %v1633
    %v1635 = vpop.f32.mrb[0].mxu0
    %v1636 = vadd.f32 0.0, %v1635
    %1637 = vdwg.mxu0
    %v1638 = vmul.f32 %v1492, %v298
    %v1639 = vmul.f32 %v1494, %v302
    %v1640 = vmul.f32 %v1563, %v306
    %v1641 = vmul.f32 %v1565, %v310
    %v1642 = vmul.f32 %v1634, %v314
    %v1643 = vmul.f32 %v1636, %v318
    %v1644 = vadd.f32 %v1638, %v1639
    %v1645 = vadd.f32 %v1644, %v1640
    %v1646 = vadd.f32 %v1645, %v1641
    %v1647 = vadd.f32 %v1646, %v1642
    %v1648 = vsel %vm76, %v1643, 0.0
    %v1649 = vadd.f32 %v1647, %v1648
    %1650 = vadd.xlane.f32.xlu0 %v1649
    %v1651 = vpop.xlane.xlu0 %1650
    %v1652 = vmul.f32 %v1651, 0.001953125
    %v1653 = vsub.f32 %v1492, %v1652
    %v1654 = vsub.f32 %v1494, %v1652
    %v1655 = vsub.f32 %v1563, %v1652
    %v1656 = vsub.f32 %v1565, %v1652
    %v1657 = vsub.f32 %v1634, %v1652
    %v1658 = vsub.f32 %v1636, %v1652
    %v1659 = vmul.f32 %v1653, %v298
    %v1660 = vmul.f32 %v1654, %v302
    %v1661 = vmul.f32 %v1655, %v306
    %v1662 = vmul.f32 %v1656, %v310
    %v1663 = vmul.f32 %v1657, %v314
    %v1664 = vmul.f32 %v1658, %v318
    %v1665 = vmul.f32 %v1659, %v1659
    %v1666 = vmul.f32 %v1660, %v1660
    %v1667 = vmul.f32 %v1661, %v1661
    %v1668 = vmul.f32 %v1662, %v1662
    %v1669 = vmul.f32 %v1663, %v1663
    %v1670 = vmul.f32 %v1664, %v1664
    %v1671 = vadd.f32 %v1665, %v1666
    %v1672 = vadd.f32 %v1671, %v1667
    %v1673 = vadd.f32 %v1672, %v1668
    %v1674 = vadd.f32 %v1673, %v1669
    %v1675 = vsel %vm76, %v1670, 0.0
    %v1676 = vadd.f32 %v1674, %v1675
    %1677 = vadd.xlane.f32.xlu0 %v1676
    %v1678 = vpop.xlane.xlu0 %1677
    %v1679 = vmul.f32 %v1678, 0.001953125
    %v1680 = vadd.f32 %v1679, 1e-05
    %v1681 = vrsqrt.pop %v1680
    %v1682 = vmul.f32 %v1049, %v1681
    %v1683 = vmul.f32 %v1652, %v1682
    %1685 = vrot.lane.b32.xlu0 %v1683, 1
    %v1686 = vpop.permute.xlu0 %1685
    %v1688 = vsub.f32 %v1049, %v1686
    %1690 = vset.pattern.permute.xlu0 6
    %1691 = vperm.xlu0 %1690, %v1682
    %v1692 = vpop.permute.xlu0 %1691
    %v1694 = vmul.f32 %v1492, %v1692
    %v1695 = vmul.f32 %v1494, %v1692
    %v1696 = vmul.f32 %v1563, %v1692
    %v1697 = vmul.f32 %v1565, %v1692
    %v1698 = vmul.f32 %v1634, %v1692
    %v1699 = vmul.f32 %v1636, %v1692
    %1701 = vset.pattern.permute.xlu0 7
    %1702 = vperm.xlu0 %1701, %v1688
    %v1703 = vpop.permute.xlu0 %1702
    %v1705 = vadd.f32 %v1694, %v1703
    %v1706 = vadd.f32 %v1695, %v1703
    %v1707 = vadd.f32 %v1696, %v1703
    %v1708 = vadd.f32 %v1697, %v1703
    %v1709 = vadd.f32 %v1698, %v1703
    %v1710 = vadd.f32 %v1699, %v1703
    %v1711 = vadd.f32 %v1415, %v1705
    %v1712 = vadd.f32 %v1416, %v1706
    %v1713 = vadd.f32 %v1417, %v1707
    %v1714 = vadd.f32 %v1418, %v1708
    %v1715 = vadd.f32 %v1419, %v1709
    %v1716 = vadd.f32 %v1420, %v1710
    %v1717 = vmax.f32 %v1711, 0.0
    %v1718 = vmax.f32 %v1712, 0.0
    %v1719 = vmax.f32 %v1713, 0.0
    %v1720 = vmax.f32 %v1714, 0.0
    %v1721 = vmax.f32 %v1715, 0.0
    %v1722 = vmax.f32 %v1716, 0.0
    %1723 = vst [vmem:[#allocation12] sm:$0xff] %v1717
    %1724 = vst [vmem:[#allocation12 + $0x8] sm:$0xff] %v1718
    %1725 = vst [vmem:[#allocation12 + $0x10] sm:$0xff] %v1719
    %1726 = vst [vmem:[#allocation12 + $0x18] sm:$0xff] %v1720
    %1727 = vst [vmem:[#allocation12 + $0x20] sm:$0xff] %v1721
    %1728 = vst.msk [vmem:[#allocation12 + $0x28] sm:$0xff] %vm76, %v1722
    // Predicated region
    $region38: #{tpu_custom_call.1} parent=1 // pred_check
      _
    $region39: #{tpu_custom_call.1} parent=1 // pred_check_branch
      %1730 = sbr.rel (0) target = $region41
    $region40: #{tpu_custom_call.1} parent=1 // pred_region
      %s1732 = ssub.s32 768, 768
      %1733 = vsyncadd [#allocation6], %s1732
      %s1735 = sshll.u32 [#allocation12], 4
      %s1736 = int_to_ptr.vmem [resolvable:$true] %s1735
      %1738 = dma.vmem_to_hbm [thread:$0]  %s1736, 768, %s5, [#allocation6]
    $region41: #{tpu_custom_call.1} parent=1 // pred_fallthru
      _
    // Predicated region
    $region42: #{tpu_custom_call.1} parent=1 // pred_check
      _
    $region43: #{tpu_custom_call.1} parent=1 // pred_check_branch
      %1740 = sbr.rel (0) target = $region45
    $region44: #{tpu_custom_call.1} parent=1 // pred_region
      %1741 = dma.done [#allocation6], 768
    $region45: #{tpu_custom_call.1} parent=1 // pred_fallthru
      _
    %1742 = vsyncpa [#allocation5], 1
    %1743 = vsyncpa [#allocation8], 1
    %1744 = vsyncpa [#allocation11], 1
    %1745 = vsyncpa [#allocation6], 1

</llo_original>
